<compile_context>
chip_gen: v5e
topology: v5e:2x2
jax: 0.10.0
libtpu: 0.0.40
codegen_flags: <defaults>
</compile_context>

<pallas_src>
import jax
import jax.numpy as jnp
from jax.experimental import pallas as pl
from jax.experimental.pallas import tpu as pltpu

LN_EPS = 1e-5


def _round_up(a, m):
    return -(-a // m) * m


def _pad_cols(a, n_cols):
    if a.shape[-1] == n_cols:
        return a
    return jnp.pad(a, ((0, 0), (0, n_cols - a.shape[-1])))


def _vmem_budget_bytes():
    """Physical VMEM minus headroom; conservative 64 MiB (v7x per-TC) fallback."""
    try:
        info = pltpu.get_tpu_info()
        phys = int(getattr(info, "vmem_capacity_bytes", 64 << 20))
    except Exception:
        phys = 64 << 20
    return max(32 << 20, phys - (16 << 20))


def _pick_tile_b(batch, per_row_bytes, resident_bytes, budget):
    """Largest batch tile (multiple of 16, <=1024) that fits the VMEM budget, with the
    grid kept >= 2 steps when the batch allows (v7x megacore)."""
    avail = budget - 2 * resident_bytes          # x2: weights may be double-buffered in fallback
    tile = avail // per_row_bytes if avail > 0 else 16
    tile = int(max(16, min(1024, (tile // 16) * 16)))
    if batch > 16:
        tile = min(tile, _round_up(-(-batch // 2), 16))
    return max(16, tile)


# ---------------------------------------------------------------------------
# Fused Pallas kernel: all hidden layers + output head for one batch tile.
# ---------------------------------------------------------------------------
def _make_fused_kernel(n_layers, h_pad, h_real, has_cats):
    inv_h = 1.0 / float(h_real)
    masked = h_pad != h_real

    def kernel(*refs):
        i = 0
        x_ref = refs[i]; i += 1                       # (TB, n_input_p) bf16, batch-tiled
        if has_cats:
            oh_ref = refs[i]; i += 1                  # (TB, cat_dim_p) bf16, batch-tiled
            wcat_ref = refs[i]; i += 1                # (cat_dim_p, L*H_pad) bf16, resident
        bias_ref = refs[i]; i += 1                    # (1, L*H_pad) f32, resident
        w_refs = refs[i:i + n_layers]; i += n_layers  # per-layer bf16 weights, resident
        zw_ref, zb_ref, o_ref = refs[i], refs[i + 1], refs[i + 2]

        h = x_ref[...]                                # (TB, n_input_p) bf16

        if has_cats:
            # Covariate contribution for all layers at once (tiny matmul, f32 accumulation).
            cb_all = jnp.dot(oh_ref[...], wcat_ref[...],
                             preferred_element_type=jnp.float32)   # (TB, L*H_pad) f32

        if masked:
            mask = (jax.lax.broadcasted_iota(jnp.int32, (1, h_pad), 1)
                    < h_real).astype(jnp.float32)

        for l in range(n_layers):
            cb = bias_ref[:, l * h_pad:(l + 1) * h_pad]            # f32 bias (never cast to bf16)
            if has_cats:
                cb = cb + cb_all[:, l * h_pad:(l + 1) * h_pad]
            y = jnp.dot(h, w_refs[l][...], preferred_element_type=jnp.float32) + cb
            # LayerNorm over the REAL channels only (no affine params), f32 math.
            mean = jnp.sum(y, axis=-1, keepdims=True) * inv_h
            centered = y - mean
            if masked:
                centered = centered * mask            # padded lanes contribute nothing
            var = jnp.sum(centered * centered, axis=-1, keepdims=True) * inv_h
            hn = centered * jax.lax.rsqrt(var + LN_EPS)
            # ReLU (dropout is identity at inference); back to bf16 for the next MXU pass.
            h = jnp.maximum(hn, 0.0).astype(jnp.bfloat16)

        # Output head: lane-padded (zero columns) so the store is lane-dense.
        o_ref[...] = jnp.dot(h, zw_ref[...], preferred_element_type=jnp.float32) + zb_ref[...]

    return kernel


# ---------------------------------------------------------------------------
# Parameter setup (deterministic, synthetic)
# ---------------------------------------------------------------------------
def init_params(key, n_input, n_output, n_hidden, n_layers, n_cat_list):
    cat_dim = sum(n for n in n_cat_list if n > 1)
    n_input_p = _round_up(n_input, 128)
    h_pad = _round_up(n_hidden, 128)
    n_out_p = _round_up(n_output, 128)
    cat_dim_p = _round_up(cat_dim, 8) if cat_dim > 0 else 0

    params = {
        "n_cat_list": tuple(n_cat_list),
        "n_input": n_input, "n_input_p": n_input_p,
        "n_hidden": n_hidden, "n_hidden_p": h_pad,
        "n_output": n_output, "n_out_p": n_out_p,
        "cat_dim": cat_dim, "cat_dim_p": cat_dim_p,
        "w_h": [], "w_cat": [], "b": [],   # f32 masters
    }

    d_in = n_input
    for _ in range(n_layers):
        key, kw, kb = jax.random.split(key, 3)
        fan_in = d_in + cat_dim            # covariates injected into every layer
        w = jax.random.normal(kw, (fan_in, n_hidden), jnp.float32) * (1.0 / jnp.sqrt(fan_in))
        b = jax.random.normal(kb, (n_hidden,), jnp.float32) * 0.01
        params["w_h"].append(w[:d_in])
        params["w_cat"].append(w[d_in:])
        params["b"].append(b)
        d_in = n_hidden

    key, kw, kb = jax.random.split(key, 3)
    z_w = jax.random.normal(kw, (n_hidden, n_output), jnp.float32) * (1.0 / jnp.sqrt(n_hidden))
    z_b = jax.random.normal(kb, (n_output,), jnp.float32) * 0.01
    params["z_w"], params["z_b"] = z_w, z_b

    # Kernel-ready versions: bf16 matmul operands, K/N dims zero-padded to 128 multiples.
    w_h_c = []
    for l, w in enumerate(params["w_h"]):
        d_in_p = n_input_p if l == 0 else h_pad
        wp = jnp.zeros((d_in_p, h_pad), jnp.float32).at[:w.shape[0], :n_hidden].set(w)
        w_h_c.append(wp.astype(jnp.bfloat16))
    params["w_h_c"] = w_h_c

    if cat_dim > 0:
        wc = jnp.zeros((cat_dim_p, n_layers * h_pad), jnp.float32)
        for l in range(n_layers):
            wc = wc.at[:cat_dim, l * h_pad:l * h_pad + n_hidden].set(params["w_cat"][l])
        params["wcat_all"] = wc.astype(jnp.bfloat16)
    else:
        params["wcat_all"] = None

    bias = jnp.zeros((1, n_layers * h_pad), jnp.float32)
    for l in range(n_layers):
        bias = bias.at[0, l * h_pad:l * h_pad + n_hidden].set(params["b"][l])
    params["bias_all"] = bias                              # stays f32 (bias precision)

    z_w_p = jnp.zeros((h_pad, n_out_p), jnp.float32).at[:n_hidden, :n_output].set(z_w)
    z_b_p = jnp.zeros((1, n_out_p), jnp.float32).at[0, :n_output].set(z_b)
    params["z_w_p"] = z_w_p.astype(jnp.bfloat16)
    params["z_b_p"] = z_b_p
    return params


def _build_onehot(params, cat_list):
    """Concatenated one-hot covariates (B, cat_dim_p) in bf16 (0/1 values are exact)."""
    if params["cat_dim_p"] == 0:
        return None
    one_hots = [jax.nn.one_hot(c, n, dtype=jnp.float32)
                for c, n in zip(cat_list, params["n_cat_list"]) if n > 1]
    oh = jnp.concatenate(one_hots, axis=-1)
    oh = _pad_cols(oh, params["cat_dim_p"])
    return oh.astype(jnp.bfloat16)


# ---------------------------------------------------------------------------
# Forward wrapper: one fused pallas_call over a batch grid
# ---------------------------------------------------------------------------
def vanilla_encoder_forward(params, x, *cat_list, tile_b=None):
    B, n_input = x.shape
    assert n_input == params["n_input"]
    H, H_pad = params["n_hidden"], params["n_hidden_p"]
    L = len(params["w_h_c"])
    n_out, n_out_p = params["n_output"], params["n_out_p"]
    n_input_p = params["n_input_p"]
    cat_dim_p = params["cat_dim_p"]
    has_cats = cat_dim_p > 0

    x_c = _pad_cols(x, n_input_p).astype(jnp.bfloat16)
    oh_c = _build_onehot(params, cat_list)

    # --- VMEM budgeting / batch-tile selection -----------------------------
    resident_bytes = (sum(int(w.size) * 2 for w in params["w_h_c"])
                      + int(params["z_w_p"].size) * 2
                      + int(params["z_b_p"].size) * 4
                      + int(params["bias_all"].size) * 4
                      + (int(params["wcat_all"].size) * 2 if has_cats else 0))
    per_row = (2 * n_input_p * 2           # x tile, double-buffered, bf16
               + 2 * cat_dim_p * 2         # one-hot tile, double-buffered, bf16
               + 2 * n_out_p * 4           # output tile, double-buffered, f32
               + L * H_pad * 4             # in-kernel covariate bias (f32)
               + 6 * H_pad * 4)            # LN / activation intermediates (f32)
    budget = _vmem_budget_bytes()
    if tile_b is None:
        tile_b = _pick_tile_b(B, per_row, resident_bytes, budget)

    # Pad batch to a multiple of the tile (padded rows are zeros; sliced off at the end).
    B_pad = _round_up(B, tile_b)
    if B_pad != B:
        x_c = jnp.pad(x_c, ((0, B_pad - B), (0, 0)))
        if has_cats:
            oh_c = jnp.pad(oh_c, ((0, B_pad - B), (0, 0)))

    vmem_needed = tile_b * per_row + 2 * resident_bytes
    vmem_limit = int(min(budget, max(32 << 20, int(vmem_needed * 1.5))))

    # --- Cost estimate for XLA scheduling ----------------------------------
    flops = 2 * B_pad * (n_input_p * H_pad + (L - 1) * H_pad * H_pad + H_pad * n_out_p)
    if has_cats:
        flops += 2 * B_pad * cat_dim_p * L * H_pad
    flops += 8 * B_pad * L * H_pad                      # LN / ReLU elementwise
    transc = B_pad * L                                   # one rsqrt per row per layer
    bytes_accessed = (B_pad * n_input_p * 2
                      + (B_pad * cat_dim_p * 2 if has_cats else 0)
                      + resident_bytes
                      + B_pad * n_out_p * 4)

    grid = (B_pad // tile_b,)

    def _run(single_buffer):
        def resident(shape):
            nd = len(shape)
            if single_buffer:
                # Constant index_map -> grid-invariant: single-buffer to save VMEM.
                return pl.BlockSpec(shape, lambda i, _nd=nd: (0,) * _nd,
                                    pipeline_mode=pl.Buffered(1))
            return pl.BlockSpec(shape, lambda i, _nd=nd: (0,) * _nd)

        in_specs = [pl.BlockSpec((tile_b, n_input_p), lambda i: (i, 0))]
        args = [x_c]
        if has_cats:
            in_specs.append(pl.BlockSpec((tile_b, cat_dim_p), lambda i: (i, 0)))
            args.append(oh_c)
            in_specs.append(resident(params["wcat_all"].shape))
            args.append(params["wcat_all"])
        in_specs.append(resident(params["bias_all"].shape))
        args.append(params["bias_all"])
        for w in params["w_h_c"]:
            in_specs.append(resident(w.shape))
            args.append(w)
        in_specs.append(resident(params["z_w_p"].shape))
        args.append(params["z_w_p"])
        in_specs.append(resident(params["z_b_p"].shape))
        args.append(params["z_b_p"])

        return pl.pallas_call(
            _make_fused_kernel(L, H_pad, H, has_cats),
            out_shape=jax.ShapeDtypeStruct((B_pad, n_out_p), jnp.float32),
            grid=grid,
            in_specs=in_specs,
            out_specs=pl.BlockSpec((tile_b, n_out_p), lambda i: (i, 0)),
            compiler_params=pltpu.CompilerParams(
                dimension_semantics=("parallel",),     # batch grid sharded across TCs (v7x)
                vmem_limit_bytes=vmem_limit,
            ),
            cost_estimate=pl.CostEstimate(
                flops=int(flops),
                transcendentals=int(transc),
                bytes_accessed=int(bytes_accessed),
            ),
        )(*args)

    try:
        z_p = _run(single_buffer=True)
    except Exception:
        # Fallback if pipeline_mode=pl.Buffered(1) is unsupported by this lowering.
        z_p = _run(single_buffer=False)

    return z_p[:B, :n_out]


# ---------------------------------------------------------------------------
# References for correctness checks
# ---------------------------------------------------------------------------
def _reference_forward_mirror(params, x, *cat_list):
    """Pure-JAX mirror of the exact kernel math (padded bf16 operands, f32 accumulation)."""
    H, H_pad = params["n_hidden"], params["n_hidden_p"]
    L = len(params["w_h_c"])
    oh = _build_onehot(params, cat_list)
    h = _pad_cols(x, params["n_input_p"]).astype(jnp.bfloat16)
    if oh is not None:
        cb_all = jnp.dot(oh, params["wcat_all"], preferred_element_type=jnp.float32)
    mask = (jnp.arange(H_pad) < H).astype(jnp.float32)[None, :]
    for l in range(L):
        cb = params["bias_all"][:, l * H_pad:(l + 1) * H_pad]
        if oh is not None:
            cb = cb + cb_all[:, l * H_pad:(l + 1) * H_pad]
        y = jnp.dot(h, params["w_h_c"][l], preferred_element_type=jnp.float32) + cb
        mean = jnp.sum(y, axis=-1, keepdims=True) / H
        c = (y - mean) * mask
        var = jnp.sum(c * c, axis=-1, keepdims=True) / H
        h = jnp.maximum(c * jax.lax.rsqrt(var + LN_EPS), 0.0).astype(jnp.bfloat16)
    z = jnp.dot(h, params["z_w_p"], preferred_element_type=jnp.float32) + params["z_b_p"]
    return z[:, :params["n_output"]]


def _reference_forward_f32(params, x, *cat_list):
    """Full-precision reference matching the original PyTorch module math."""
    one_hots = [jax.nn.one_hot(c, n, dtype=jnp.float32)
                for c, n in zip(cat_list, params["n_cat_list"]) if n > 1]
    oh = jnp.concatenate(one_hots, axis=-1) if one_hots else None
    h = x
    for w, wc, b in zip(params["w_h"], params["w_cat"], params["b"]):
        y = h @ w + b
        if oh is not None and wc.shape[0] > 0:
            y = y + oh @ wc
        mean = jnp.mean(y, axis=-1, keepdims=True)
        var = jnp.mean((y - mean) ** 2, axis=-1, keepdims=True)
        h = jnp.maximum((y - mean) * jax.lax.rsqrt(var + LN_EPS), 0.0)
    return h @ params["z_w"] + params["z_b"]


if __name__ == "__main__":
    # Small, module-consistent shapes (batch chosen to exercise the batch grid).
    batch = 64
    n_input, n_hidden, n_output, n_layers = 16, 32, 8, 2
    n_cat_list = [3, 4]

    key = jax.random.PRNGKey(0)
    key, kx, kc0, kc1 = jax.random.split(key, 4)
    x = jax.random.normal(kx, (batch, n_input), jnp.float32)
    cat0 = jax.random.randint(kc0, (batch,), 0, n_cat_list[0])
    cat1 = jax.random.randint(kc1, (batch,), 0, n_cat_list[1])

    params = init_params(key, n_input, n_output, n_hidden, n_layers, n_cat_list)

    z = vanilla_encoder_forward(params, x, cat0, cat1)   # tile_b auto-derived from VMEM budget
    z = jax.block_until_ready(z)
    assert z.shape == (batch, n_output)
    assert bool(jnp.isfinite(z).all())

    # Tight check against a pure-JAX mirror of the exact kernel math.
    z_mirror = _reference_forward_mirror(params, x, cat0, cat1)
    assert jnp.allclose(z, z_mirror, atol=2e-3, rtol=2e-3), "Pallas output mismatch vs bf16 mirror"

    # Sanity check against the full-f32 module math (bf16 matmul rounding tolerance).
    # NOTE: inter-layer activations are intentionally bf16 (MXU operands) -> loose tolerance.
    z_f32 = _reference_forward_f32(params, x, cat0, cat1)
    assert jnp.allclose(z, z_f32, atol=1e-1, rtol=1e-1), "Pallas output mismatch vs f32 reference"

    # TODO(synk): dropout (rate=0.1) is modeled as identity (eval mode); training-mode dropout
    # would use pltpu.prng_seed/prng_random_bits inside the fused kernel.
    print("KERNEL_OK")
</pallas_src>

<mosaic_0001>
module attributes {stable_mosaic.version = 11 : i64} {
  func.func @kernel(%arg0: i32, %arg1: memref<32x128xbf16, #tpu.memory_space<vmem>>, %arg2: memref<32x8xbf16, #tpu.memory_space<vmem>>, %arg3: memref<8x256xbf16, #tpu.memory_space<vmem>>, %arg4: memref<1x256xf32, #tpu.memory_space<vmem>>, %arg5: memref<128x128xbf16, #tpu.memory_space<vmem>>, %arg6: memref<128x128xbf16, #tpu.memory_space<vmem>>, %arg7: memref<128x128xbf16, #tpu.memory_space<vmem>>, %arg8: memref<1x128xf32, #tpu.memory_space<vmem>>, %arg9: memref<32x128xf32, #tpu.memory_space<vmem>>) attributes {dimension_semantics = [#tpu.dimension_semantics<parallel>], iteration_bounds = array<i64: 2>, scalar_prefetch = 0 : i64, scratch_operands = 0 : i64, tpu.core_type = #tpu.core_type<tc>, window_params = [{transform_indices = @transform_0, window_bounds = array<i64: 32, 128>}, {transform_indices = @transform_1, window_bounds = array<i64: 32, 8>}, {pipeline_mode = #tpu.pipeline_mode<synchronous>, transform_indices = @transform_2, window_bounds = array<i64: 8, 256>}, {pipeline_mode = #tpu.pipeline_mode<synchronous>, transform_indices = @transform_3, window_bounds = array<i64: 1, 256>}, {pipeline_mode = #tpu.pipeline_mode<synchronous>, transform_indices = @transform_4, window_bounds = array<i64: 128, 128>}, {pipeline_mode = #tpu.pipeline_mode<synchronous>, transform_indices = @transform_5, window_bounds = array<i64: 128, 128>}, {pipeline_mode = #tpu.pipeline_mode<synchronous>, transform_indices = @transform_6, window_bounds = array<i64: 128, 128>}, {pipeline_mode = #tpu.pipeline_mode<synchronous>, transform_indices = @transform_7, window_bounds = array<i64: 1, 128>}, {transform_indices = @transform_8, window_bounds = array<i64: 32, 128>}]} {
    %c0 = arith.constant 0 : index
    %c0_0 = arith.constant 0 : index
    %0 = vector.load %arg1[%c0, %c0_0] : memref<32x128xbf16, #tpu.memory_space<vmem>>, vector<32x128xbf16>
    %c0_1 = arith.constant 0 : index
    %c0_2 = arith.constant 0 : index
    %1 = vector.load %arg2[%c0_1, %c0_2] : memref<32x8xbf16, #tpu.memory_space<vmem>>, vector<32x8xbf16>
    %c0_3 = arith.constant 0 : index
    %c0_4 = arith.constant 0 : index
    %2 = vector.load %arg3[%c0_3, %c0_4] : memref<8x256xbf16, #tpu.memory_space<vmem>>, vector<8x256xbf16>
    %cst = arith.constant dense<0.000000e+00> : vector<32x256xf32>
    %3 = tpu.matmul %1, %2, %cst {dimension_numbers = #tpu.dot_dimension_numbers<[1], [0], [0], [1], [0, 0, 1, 1], [], []>} : vector<32x8xbf16>, vector<8x256xbf16>, vector<32x256xf32> -> vector<32x256xf32>
    %4 = tpu.iota {dimensions = array<i32: 1>} : vector<1x128xi32>
    %c32_i32 = arith.constant 32 : i32
    %5 = vector.broadcast %c32_i32 : i32 to vector<1x128xi32>
    %6 = arith.cmpi slt, %4, %5 : vector<1x128xi32>
    %7 = arith.extui %6 : vector<1x128xi1> to vector<1x128xi32>
    %8 = arith.sitofp %7 : vector<1x128xi32> to vector<1x128xf32>
    %c0_5 = arith.constant 0 : index
    %c0_6 = arith.constant 0 : index
    %9 = vector.load %arg4[%c0_5, %c0_6] : memref<1x256xf32, #tpu.memory_space<vmem>>, vector<1x128xf32>
    %10 = vector.extract_strided_slice %3 {offsets = [0, 0], sizes = [32, 128], strides = [1, 1]} : vector<32x256xf32> to vector<32x128xf32>
    %11 = vector.broadcast %9 : vector<1x128xf32> to vector<32x128xf32>
    %12 = arith.addf %11, %10 : vector<32x128xf32>
    %c0_7 = arith.constant 0 : index
    %c0_8 = arith.constant 0 : index
    %13 = vector.load %arg5[%c0_7, %c0_8] : memref<128x128xbf16, #tpu.memory_space<vmem>>, vector<128x128xbf16>
    %cst_9 = arith.constant dense<0.000000e+00> : vector<32x128xf32>
    %14 = tpu.matmul %0, %13, %cst_9 {dimension_numbers = #tpu.dot_dimension_numbers<[1], [0], [0], [1], [0, 0, 1, 1], [], []>} : vector<32x128xbf16>, vector<128x128xbf16>, vector<32x128xf32> -> vector<32x128xf32>
    %15 = arith.addf %14, %12 : vector<32x128xf32>
    %cst_10 = arith.constant dense<0.000000e+00> : vector<32xf32>
    %16 = vector.multi_reduction <add>, %15, %cst_10 [1] : vector<32x128xf32> to vector<32xf32>
    %17 = vector.shape_cast %16 : vector<32xf32> to vector<32x1xf32>
    %cst_11 = arith.constant 3.125000e-02 : f32
    %18 = vector.broadcast %cst_11 : f32 to vector<32x1xf32>
    %19 = arith.mulf %17, %18 : vector<32x1xf32>
    %20 = vector.broadcast %19 : vector<32x1xf32> to vector<32x128xf32>
    %21 = arith.subf %15, %20 : vector<32x128xf32>
    %22 = vector.broadcast %8 : vector<1x128xf32> to vector<32x128xf32>
    %23 = arith.mulf %21, %22 : vector<32x128xf32>
    %24 = arith.mulf %23, %23 : vector<32x128xf32>
    %cst_12 = arith.constant dense<0.000000e+00> : vector<32xf32>
    %25 = vector.multi_reduction <add>, %24, %cst_12 [1] : vector<32x128xf32> to vector<32xf32>
    %26 = vector.shape_cast %25 : vector<32xf32> to vector<32x1xf32>
    %cst_13 = arith.constant 3.125000e-02 : f32
    %27 = vector.broadcast %cst_13 : f32 to vector<32x1xf32>
    %28 = arith.mulf %26, %27 : vector<32x1xf32>
    %cst_14 = arith.constant 9.99999974E-6 : f32
    %29 = vector.broadcast %cst_14 : f32 to vector<32x1xf32>
    %30 = arith.addf %28, %29 : vector<32x1xf32>
    %31 = math.rsqrt %30 : vector<32x1xf32>
    %32 = vector.broadcast %31 : vector<32x1xf32> to vector<32x128xf32>
    %33 = arith.mulf %23, %32 : vector<32x128xf32>
    %cst_15 = arith.constant 0.000000e+00 : f32
    %34 = vector.broadcast %cst_15 : f32 to vector<32x128xf32>
    %35 = arith.maximumf %33, %34 : vector<32x128xf32>
    %36 = arith.truncf %35 : vector<32x128xf32> to vector<32x128xbf16>
    %c0_16 = arith.constant 0 : index
    %c128 = arith.constant 128 : index
    %37 = vector.load %arg4[%c0_16, %c128] : memref<1x256xf32, #tpu.memory_space<vmem>>, vector<1x128xf32>
    %38 = vector.extract_strided_slice %3 {offsets = [0, 128], sizes = [32, 128], strides = [1, 1]} : vector<32x256xf32> to vector<32x128xf32>
    %39 = vector.broadcast %37 : vector<1x128xf32> to vector<32x128xf32>
    %40 = arith.addf %39, %38 : vector<32x128xf32>
    %c0_17 = arith.constant 0 : index
    %c0_18 = arith.constant 0 : index
    %41 = vector.load %arg6[%c0_17, %c0_18] : memref<128x128xbf16, #tpu.memory_space<vmem>>, vector<128x128xbf16>
    %cst_19 = arith.constant dense<0.000000e+00> : vector<32x128xf32>
    %42 = tpu.matmul %36, %41, %cst_19 {dimension_numbers = #tpu.dot_dimension_numbers<[1], [0], [0], [1], [0, 0, 1, 1], [], []>} : vector<32x128xbf16>, vector<128x128xbf16>, vector<32x128xf32> -> vector<32x128xf32>
    %43 = arith.addf %42, %40 : vector<32x128xf32>
    %cst_20 = arith.constant dense<0.000000e+00> : vector<32xf32>
    %44 = vector.multi_reduction <add>, %43, %cst_20 [1] : vector<32x128xf32> to vector<32xf32>
    %45 = vector.shape_cast %44 : vector<32xf32> to vector<32x1xf32>
    %cst_21 = arith.constant 3.125000e-02 : f32
    %46 = vector.broadcast %cst_21 : f32 to vector<32x1xf32>
    %47 = arith.mulf %45, %46 : vector<32x1xf32>
    %48 = vector.broadcast %47 : vector<32x1xf32> to vector<32x128xf32>
    %49 = arith.subf %43, %48 : vector<32x128xf32>
    %50 = vector.broadcast %8 : vector<1x128xf32> to vector<32x128xf32>
    %51 = arith.mulf %49, %50 : vector<32x128xf32>
    %52 = arith.mulf %51, %51 : vector<32x128xf32>
    %cst_22 = arith.constant dense<0.000000e+00> : vector<32xf32>
    %53 = vector.multi_reduction <add>, %52, %cst_22 [1] : vector<32x128xf32> to vector<32xf32>
    %54 = vector.shape_cast %53 : vector<32xf32> to vector<32x1xf32>
    %cst_23 = arith.constant 3.125000e-02 : f32
    %55 = vector.broadcast %cst_23 : f32 to vector<32x1xf32>
    %56 = arith.mulf %54, %55 : vector<32x1xf32>
    %cst_24 = arith.constant 9.99999974E-6 : f32
    %57 = vector.broadcast %cst_24 : f32 to vector<32x1xf32>
    %58 = arith.addf %56, %57 : vector<32x1xf32>
    %59 = math.rsqrt %58 : vector<32x1xf32>
    %60 = vector.broadcast %59 : vector<32x1xf32> to vector<32x128xf32>
    %61 = arith.mulf %51, %60 : vector<32x128xf32>
    %cst_25 = arith.constant 0.000000e+00 : f32
    %62 = vector.broadcast %cst_25 : f32 to vector<32x128xf32>
    %63 = arith.maximumf %61, %62 : vector<32x128xf32>
    %64 = arith.truncf %63 : vector<32x128xf32> to vector<32x128xbf16>
    %c0_26 = arith.constant 0 : index
    %c0_27 = arith.constant 0 : index
    %65 = vector.load %arg7[%c0_26, %c0_27] : memref<128x128xbf16, #tpu.memory_space<vmem>>, vector<128x128xbf16>
    %cst_28 = arith.constant dense<0.000000e+00> : vector<32x128xf32>
    %66 = tpu.matmul %64, %65, %cst_28 {dimension_numbers = #tpu.dot_dimension_numbers<[1], [0], [0], [1], [0, 0, 1, 1], [], []>} : vector<32x128xbf16>, vector<128x128xbf16>, vector<32x128xf32> -> vector<32x128xf32>
    %c0_29 = arith.constant 0 : index
    %c0_30 = arith.constant 0 : index
    %67 = vector.load %arg8[%c0_29, %c0_30] : memref<1x128xf32, #tpu.memory_space<vmem>>, vector<1x128xf32>
    %68 = vector.broadcast %67 : vector<1x128xf32> to vector<32x128xf32>
    %69 = arith.addf %66, %68 : vector<32x128xf32>
    %c0_31 = arith.constant 0 : index
    %c0_32 = arith.constant 0 : index
    %70 = vector.load %arg9[%c0_31, %c0_32] : memref<32x128xf32, #tpu.memory_space<vmem>>, vector<32x128xf32>
    tpu.vector_store %arg9[%c0_31, %c0_32], %69 {strides = array<i32>} : memref<32x128xf32, #tpu.memory_space<vmem>>, vector<32x128xf32>,
    return
  }
  func.func @transform_0(%arg0: i32) -> (i32, i32) {
    %c0_i32 = arith.constant 0 : i32
    %c0_i32_0 = arith.constant 0 : i32
    return %arg0, %c0_i32 : i32, i32
  }
  func.func @transform_1(%arg0: i32) -> (i32, i32) {
    %c0_i32 = arith.constant 0 : i32
    %c0_i32_0 = arith.constant 0 : i32
    return %arg0, %c0_i32 : i32, i32
  }
  func.func @transform_2(%arg0: i32) -> (i32, i32) {
    %c0_i32 = arith.constant 0 : i32
    %c0_i32_0 = arith.constant 0 : i32
    %c0_i32_1 = arith.constant 0 : i32
    return %c0_i32, %c0_i32_0 : i32, i32
  }
  func.func @transform_3(%arg0: i32) -> (i32, i32) {
    %c0_i32 = arith.constant 0 : i32
    %c0_i32_0 = arith.constant 0 : i32
    %c0_i32_1 = arith.constant 0 : i32
    return %c0_i32, %c0_i32_0 : i32, i32
  }
  func.func @transform_4(%arg0: i32) -> (i32, i32) {
    %c0_i32 = arith.constant 0 : i32
    %c0_i32_0 = arith.constant 0 : i32
    %c0_i32_1 = arith.constant 0 : i32
    return %c0_i32, %c0_i32_0 : i32, i32
  }
  func.func @transform_5(%arg0: i32) -> (i32, i32) {
    %c0_i32 = arith.constant 0 : i32
    %c0_i32_0 = arith.constant 0 : i32
    %c0_i32_1 = arith.constant 0 : i32
    return %c0_i32, %c0_i32_0 : i32, i32
  }
  func.func @transform_6(%arg0: i32) -> (i32, i32) {
    %c0_i32 = arith.constant 0 : i32
    %c0_i32_0 = arith.constant 0 : i32
    %c0_i32_1 = arith.constant 0 : i32
    return %c0_i32, %c0_i32_0 : i32, i32
  }
  func.func @transform_7(%arg0: i32) -> (i32, i32) {
    %c0_i32 = arith.constant 0 : i32
    %c0_i32_0 = arith.constant 0 : i32
    %c0_i32_1 = arith.constant 0 : i32
    return %c0_i32, %c0_i32_0 : i32, i32
  }
  func.func @transform_8(%arg0: i32) -> (i32, i32) {
    %c0_i32 = arith.constant 0 : i32
    %c0_i32_0 = arith.constant 0 : i32
    return %arg0, %c0_i32 : i32, i32
  }
}

module attributes {stable_mosaic.version = 11 : i64} {
  func.func @kernel(%arg0: i32, %arg1: memref<32x128xbf16, #tpu.memory_space<vmem>>, %arg2: memref<32x8xbf16, #tpu.memory_space<vmem>>, %arg3: memref<8x256xbf16, #tpu.memory_space<vmem>>, %arg4: memref<1x256xf32, #tpu.memory_space<vmem>>, %arg5: memref<128x128xbf16, #tpu.memory_space<vmem>>, %arg6: memref<128x128xbf16, #tpu.memory_space<vmem>>, %arg7: memref<128x128xbf16, #tpu.memory_space<vmem>>, %arg8: memref<1x128xf32, #tpu.memory_space<vmem>>, %arg9: memref<32x128xf32, #tpu.memory_space<vmem>>) attributes {dimension_semantics = [#tpu.dimension_semantics<parallel>], iteration_bounds = array<i64: 2>, scalar_prefetch = 0 : i64, scratch_operands = 0 : i64, tpu.core_type = #tpu.core_type<tc>, window_params = [{transform_indices = @transform_0, window_bounds = array<i64: 32, 128>}, {transform_indices = @transform_1, window_bounds = array<i64: 32, 8>}, {pipeline_mode = #tpu.pipeline_mode<synchronous>, transform_indices = @transform_2, window_bounds = array<i64: 8, 256>}, {pipeline_mode = #tpu.pipeline_mode<synchronous>, transform_indices = @transform_3, window_bounds = array<i64: 1, 256>}, {pipeline_mode = #tpu.pipeline_mode<synchronous>, transform_indices = @transform_4, window_bounds = array<i64: 128, 128>}, {pipeline_mode = #tpu.pipeline_mode<synchronous>, transform_indices = @transform_5, window_bounds = array<i64: 128, 128>}, {pipeline_mode = #tpu.pipeline_mode<synchronous>, transform_indices = @transform_6, window_bounds = array<i64: 128, 128>}, {pipeline_mode = #tpu.pipeline_mode<synchronous>, transform_indices = @transform_7, window_bounds = array<i64: 1, 128>}, {transform_indices = @transform_8, window_bounds = array<i64: 32, 128>}]} {
    %c0 = arith.constant 0 : index
    %c0_0 = arith.constant 0 : index
    %0 = vector.load %arg1[%c0, %c0_0] : memref<32x128xbf16, #tpu.memory_space<vmem>>, vector<32x128xbf16>
    %c0_1 = arith.constant 0 : index
    %c0_2 = arith.constant 0 : index
    %1 = vector.load %arg2[%c0_1, %c0_2] : memref<32x8xbf16, #tpu.memory_space<vmem>>, vector<32x8xbf16>
    %c0_3 = arith.constant 0 : index
    %c0_4 = arith.constant 0 : index
    %2 = vector.load %arg3[%c0_3, %c0_4] : memref<8x256xbf16, #tpu.memory_space<vmem>>, vector<8x256xbf16>
    %cst = arith.constant dense<0.000000e+00> : vector<32x256xf32>
    %3 = tpu.matmul %1, %2, %cst {dimension_numbers = #tpu.dot_dimension_numbers<[1], [0], [0], [1], [0, 0, 1, 1], [], []>} : vector<32x8xbf16>, vector<8x256xbf16>, vector<32x256xf32> -> vector<32x256xf32>
    %4 = tpu.iota {dimensions = array<i32: 1>} : vector<1x128xi32>
    %c32_i32 = arith.constant 32 : i32
    %5 = vector.broadcast %c32_i32 : i32 to vector<1x128xi32>
    %6 = arith.cmpi slt, %4, %5 : vector<1x128xi32>
    %7 = arith.extui %6 : vector<1x128xi1> to vector<1x128xi32>
    %8 = arith.sitofp %7 : vector<1x128xi32> to vector<1x128xf32>
    %c0_5 = arith.constant 0 : index
    %c0_6 = arith.constant 0 : index
    %9 = vector.load %arg4[%c0_5, %c0_6] : memref<1x256xf32, #tpu.memory_space<vmem>>, vector<1x128xf32>
    %10 = vector.extract_strided_slice %3 {offsets = [0, 0], sizes = [32, 128], strides = [1, 1]} : vector<32x256xf32> to vector<32x128xf32>
    %11 = vector.broadcast %9 : vector<1x128xf32> to vector<32x128xf32>
    %12 = arith.addf %11, %10 : vector<32x128xf32>
    %c0_7 = arith.constant 0 : index
    %c0_8 = arith.constant 0 : index
    %13 = vector.load %arg5[%c0_7, %c0_8] : memref<128x128xbf16, #tpu.memory_space<vmem>>, vector<128x128xbf16>
    %cst_9 = arith.constant dense<0.000000e+00> : vector<32x128xf32>
    %14 = tpu.matmul %0, %13, %cst_9 {dimension_numbers = #tpu.dot_dimension_numbers<[1], [0], [0], [1], [0, 0, 1, 1], [], []>} : vector<32x128xbf16>, vector<128x128xbf16>, vector<32x128xf32> -> vector<32x128xf32>
    %15 = arith.addf %14, %12 : vector<32x128xf32>
    %cst_10 = arith.constant dense<0.000000e+00> : vector<32xf32>
    %16 = vector.multi_reduction <add>, %15, %cst_10 [1] : vector<32x128xf32> to vector<32xf32>
    %17 = vector.shape_cast %16 : vector<32xf32> to vector<32x1xf32>
    %cst_11 = arith.constant 3.125000e-02 : f32
    %18 = vector.broadcast %cst_11 : f32 to vector<32x1xf32>
    %19 = arith.mulf %17, %18 : vector<32x1xf32>
    %20 = vector.broadcast %19 : vector<32x1xf32> to vector<32x128xf32>
    %21 = arith.subf %15, %20 : vector<32x128xf32>
    %22 = vector.broadcast %8 : vector<1x128xf32> to vector<32x128xf32>
    %23 = arith.mulf %21, %22 : vector<32x128xf32>
    %24 = arith.mulf %23, %23 : vector<32x128xf32>
    %cst_12 = arith.constant dense<0.000000e+00> : vector<32xf32>
    %25 = vector.multi_reduction <add>, %24, %cst_12 [1] : vector<32x128xf32> to vector<32xf32>
    %26 = vector.shape_cast %25 : vector<32xf32> to vector<32x1xf32>
    %cst_13 = arith.constant 3.125000e-02 : f32
    %27 = vector.broadcast %cst_13 : f32 to vector<32x1xf32>
    %28 = arith.mulf %26, %27 : vector<32x1xf32>
    %cst_14 = arith.constant 9.99999974E-6 : f32
    %29 = vector.broadcast %cst_14 : f32 to vector<32x1xf32>
    %30 = arith.addf %28, %29 : vector<32x1xf32>
    %31 = math.rsqrt %30 : vector<32x1xf32>
    %32 = vector.broadcast %31 : vector<32x1xf32> to vector<32x128xf32>
    %33 = arith.mulf %23, %32 : vector<32x128xf32>
    %cst_15 = arith.constant 0.000000e+00 : f32
    %34 = vector.broadcast %cst_15 : f32 to vector<32x128xf32>
    %35 = arith.maximumf %33, %34 : vector<32x128xf32>
    %36 = arith.truncf %35 : vector<32x128xf32> to vector<32x128xbf16>
    %c0_16 = arith.constant 0 : index
    %c128 = arith.constant 128 : index
    %37 = vector.load %arg4[%c0_16, %c128] : memref<1x256xf32, #tpu.memory_space<vmem>>, vector<1x128xf32>
    %38 = vector.extract_strided_slice %3 {offsets = [0, 128], sizes = [32, 128], strides = [1, 1]} : vector<32x256xf32> to vector<32x128xf32>
    %39 = vector.broadcast %37 : vector<1x128xf32> to vector<32x128xf32>
    %40 = arith.addf %39, %38 : vector<32x128xf32>
    %c0_17 = arith.constant 0 : index
    %c0_18 = arith.constant 0 : index
    %41 = vector.load %arg6[%c0_17, %c0_18] : memref<128x128xbf16, #tpu.memory_space<vmem>>, vector<128x128xbf16>
    %cst_19 = arith.constant dense<0.000000e+00> : vector<32x128xf32>
    %42 = tpu.matmul %36, %41, %cst_19 {dimension_numbers = #tpu.dot_dimension_numbers<[1], [0], [0], [1], [0, 0, 1, 1], [], []>} : vector<32x128xbf16>, vector<128x128xbf16>, vector<32x128xf32> -> vector<32x128xf32>
    %43 = arith.addf %42, %40 : vector<32x128xf32>
    %cst_20 = arith.constant dense<0.000000e+00> : vector<32xf32>
    %44 = vector.multi_reduction <add>, %43, %cst_20 [1] : vector<32x128xf32> to vector<32xf32>
    %45 = vector.shape_cast %44 : vector<32xf32> to vector<32x1xf32>
    %cst_21 = arith.constant 3.125000e-02 : f32
    %46 = vector.broadcast %cst_21 : f32 to vector<32x1xf32>
    %47 = arith.mulf %45, %46 : vector<32x1xf32>
    %48 = vector.broadcast %47 : vector<32x1xf32> to vector<32x128xf32>
    %49 = arith.subf %43, %48 : vector<32x128xf32>
    %50 = vector.broadcast %8 : vector<1x128xf32> to vector<32x128xf32>
    %51 = arith.mulf %49, %50 : vector<32x128xf32>
    %52 = arith.mulf %51, %51 : vector<32x128xf32>
    %cst_22 = arith.constant dense<0.000000e+00> : vector<32xf32>
    %53 = vector.multi_reduction <add>, %52, %cst_22 [1] : vector<32x128xf32> to vector<32xf32>
    %54 = vector.shape_cast %53 : vector<32xf32> to vector<32x1xf32>
    %cst_23 = arith.constant 3.125000e-02 : f32
    %55 = vector.broadcast %cst_23 : f32 to vector<32x1xf32>
    %56 = arith.mulf %54, %55 : vector<32x1xf32>
    %cst_24 = arith.constant 9.99999974E-6 : f32
    %57 = vector.broadcast %cst_24 : f32 to vector<32x1xf32>
    %58 = arith.addf %56, %57 : vector<32x1xf32>
    %59 = math.rsqrt %58 : vector<32x1xf32>
    %60 = vector.broadcast %59 : vector<32x1xf32> to vector<32x128xf32>
    %61 = arith.mulf %51, %60 : vector<32x128xf32>
    %cst_25 = arith.constant 0.000000e+00 : f32
    %62 = vector.broadcast %cst_25 : f32 to vector<32x128xf32>
    %63 = arith.maximumf %61, %62 : vector<32x128xf32>
    %64 = arith.truncf %63 : vector<32x128xf32> to vector<32x128xbf16>
    %c0_26 = arith.constant 0 : index
    %c0_27 = arith.constant 0 : index
    %65 = vector.load %arg7[%c0_26, %c0_27] : memref<128x128xbf16, #tpu.memory_space<vmem>>, vector<128x128xbf16>
    %cst_28 = arith.constant dense<0.000000e+00> : vector<32x128xf32>
    %66 = tpu.matmul %64, %65, %cst_28 {dimension_numbers = #tpu.dot_dimension_numbers<[1], [0], [0], [1], [0, 0, 1, 1], [], []>} : vector<32x128xbf16>, vector<128x128xbf16>, vector<32x128xf32> -> vector<32x128xf32>
    %c0_29 = arith.constant 0 : index
    %c0_30 = arith.constant 0 : index
    %67 = vector.load %arg8[%c0_29, %c0_30] : memref<1x128xf32, #tpu.memory_space<vmem>>, vector<1x128xf32>
    %68 = vector.broadcast %67 : vector<1x128xf32> to vector<32x128xf32>
    %69 = arith.addf %66, %68 : vector<32x128xf32>
    %c0_31 = arith.constant 0 : index
    %c0_32 = arith.constant 0 : index
    %70 = vector.load %arg9[%c0_31, %c0_32] : memref<32x128xf32, #tpu.memory_space<vmem>>, vector<32x128xf32>
    tpu.vector_store %arg9[%c0_31, %c0_32], %69 {strides = array<i32>} : memref<32x128xf32, #tpu.memory_space<vmem>>, vector<32x128xf32>,
    return
  }
  func.func @transform_0(%arg0: i32) -> (i32, i32) {
    %c0_i32 = arith.constant 0 : i32
    %c0_i32_0 = arith.constant 0 : i32
    return %arg0, %c0_i32 : i32, i32
  }
  func.func @transform_1(%arg0: i32) -> (i32, i32) {
    %c0_i32 = arith.constant 0 : i32
    %c0_i32_0 = arith.constant 0 : i32
    return %arg0, %c0_i32 : i32, i32
  }
  func.func @transform_2(%arg0: i32) -> (i32, i32) {
    %c0_i32 = arith.constant 0 : i32
    %c0_i32_0 = arith.constant 0 : i32
    %c0_i32_1 = arith.constant 0 : i32
    return %c0_i32, %c0_i32_0 : i32, i32
  }
  func.func @transform_3(%arg0: i32) -> (i32, i32) {
    %c0_i32 = arith.constant 0 : i32
    %c0_i32_0 = arith.constant 0 : i32
    %c0_i32_1 = arith.constant 0 : i32
    return %c0_i32, %c0_i32_0 : i32, i32
  }
  func.func @transform_4(%arg0: i32) -> (i32, i32) {
    %c0_i32 = arith.constant 0 : i32
    %c0_i32_0 = arith.constant 0 : i32
    %c0_i32_1 = arith.constant 0 : i32
    return %c0_i32, %c0_i32_0 : i32, i32
  }
  func.func @transform_5(%arg0: i32) -> (i32, i32) {
    %c0_i32 = arith.constant 0 : i32
    %c0_i32_0 = arith.constant 0 : i32
    %c0_i32_1 = arith.constant 0 : i32
    return %c0_i32, %c0_i32_0 : i32, i32
  }
  func.func @transform_6(%arg0: i32) -> (i32, i32) {
    %c0_i32 = arith.constant 0 : i32
    %c0_i32_0 = arith.constant 0 : i32
    %c0_i32_1 = arith.constant 0 : i32
    return %c0_i32, %c0_i32_0 : i32, i32
  }
  func.func @transform_7(%arg0: i32) -> (i32, i32) {
    %c0_i32 = arith.constant 0 : i32
    %c0_i32_0 = arith.constant 0 : i32
    %c0_i32_1 = arith.constant 0 : i32
    return %c0_i32, %c0_i32_0 : i32, i32
  }
  func.func @transform_8(%arg0: i32) -> (i32, i32) {
    %c0_i32 = arith.constant 0 : i32
    %c0_i32_0 = arith.constant 0 : i32
    return %arg0, %c0_i32 : i32, i32
  }
}

</mosaic_0001>

<llo_original>
// kernel: tpu_custom_call.1
$region0: #{tpu_custom_call.1}
  #allocation0 [shape = 'u32[]', space=smem, size = 0x4, offset = 0x4, fixed_abs, tag = 'smem constant byte address 0x4 - core index']
  #allocation1 [shape = 'u32[72,128]{1,0:T(1,128)}', space=vmem, size = 0x9000, scoped, tag = 'internal scratch']
  %s0 = inlined_call_operand.vmem [shape: bf16[64,128], index: 0, kind: input, shape index: {}]
  %s1 = inlined_call_operand.vmem [shape: bf16[64,8], index: 1, kind: input, shape index: {}]
  %s2 = inlined_call_operand.hbm [shape: bf16[8,256], index: 2, kind: input, shape index: {}]
  %s3 = inlined_call_operand.vmem [shape: f32[1,256], index: 3, kind: input, shape index: {}]
  %s4 = inlined_call_operand.hbm [shape: bf16[128,128], index: 4, kind: input, shape index: {}]
  %s5 = inlined_call_operand.hbm [shape: bf16[128,128], index: 5, kind: input, shape index: {}]
  %s6 = inlined_call_operand.hbm [shape: bf16[128,128], index: 6, kind: input, shape index: {}]
  %s7 = inlined_call_operand.vmem [shape: f32[1,128], index: 7, kind: input, shape index: {}]
  %s8 = inlined_call_operand.hbm [shape: f32[64,128], index: 8, kind: output, shape index: {}]
  %s9 = sld [smem:[#allocation0]]
  $region81: #{tpu_custom_call.1} parent=0
    _
  %s11 = ssub.s32 1, %s9
  %s12 = scalar_select 0, %s11, %s9
  $region1: #{tpu_custom_call.1} parent=0
    #allocation2 [shape = 'u8[4096]{0}', space=vmem, size = 0x1000, scoped, tag = 'input window, operand 2, single buffered']
    #allocation3 [shape = 's32[2]{0}', space=sflag, size = 0x8, scoped, tag = 'scoped memory for tpu_custom_call.1']
    #allocation4 [shape = 's32[2]{0}', space=sflag, size = 0x8, scoped, tag = 'scoped memory for tpu_custom_call.1']
    #allocation5 [shape = 'u8[32768]{0}', space=vmem, size = 0x8000, scoped, tag = 'input window, operand 4, single buffered']
    #allocation6 [shape = 's32[1]{0}', space=sflag, size = 0x4, scoped, tag = 'scoped memory for tpu_custom_call.1']
    #allocation7 [shape = 'u8[32768]{0}', space=vmem, size = 0x8000, scoped, tag = 'input window, operand 5, single buffered']
    #allocation8 [shape = 'u8[32768]{0}', space=vmem, size = 0x8000, scoped, tag = 'input window, operand 6, single buffered']
    #allocation9 [shape = 's32[1]{0}', space=sflag, size = 0x4, scoped, tag = 'scoped memory for tpu_custom_call.1']
    #allocation10 [shape = 'u8[32768]{0}', space=vmem, size = 0x8000, scoped, tag = 'output window, operand 0']
    %13 = vsyncpa [#allocation3], 0
    %14 = vsyncpa [#allocation6], 0
    %15 = vsyncpa [#allocation9], 0
    %16 = vsyncpa [#allocation4], 0
    %s17 = scalar_lea.sflag [#allocation4], 1
    %18 = vsyncpa %s17, 0
    loop: start=0, step=1, limit=4
    $region2: #{tpu_custom_call.1} parent=1 // loop_pre_header
      _
    $region3: #{tpu_custom_call.1} parent=1 // loop_header
      %s20 = sphi 0, %s24
      %p21 = scmp.ge.s32.totalorder %s20, 4
      %s30 = sphi 0, %s32
      %s33 = sphi 0, %s30
      %s34 = sphi 0, %s33
      %s50 = sphi 0, %s34
      %s56 = sphi 0, %s58
      %s59 = sphi 0, %s56
      %s60 = sphi 0, %s59
      %s76 = sphi 0, %s60
      %s80 = sphi 0, %s80
      %s82 = sphi 0, %s80
      %s83 = sphi 0, %s82
      %s97 = sphi 0, %s83
      %s101 = sphi 0, %s101
      %s103 = sphi 0, %s101
      %s104 = sphi 0, %s103
      %s118 = sphi 0, %s104
      %s122 = sphi 0, %s122
      %s124 = sphi 0, %s122
      %s125 = sphi 0, %s124
      %s139 = sphi 0, %s125
      %s143 = sphi 0, %s143
      %s145 = sphi 0, %s143
      %s146 = sphi 0, %s145
      %s160 = sphi 0, %s146
      %s164 = sphi 0, %s164
      %s166 = sphi 0, %s164
      %s167 = sphi 0, %s166
      %s181 = sphi 0, %s167
      %s185 = sphi 0, %s185
      %s187 = sphi 0, %s185
      %s188 = sphi 0, %s187
      %s202 = sphi 0, %s188
      %s208 = sphi 0, %s210
      %s211 = sphi 0, %s208
      %s212 = sphi 0, %s211
      %s228 = sphi 0, %s212
    $region4: #{tpu_custom_call.1} parent=1 // loop_header_branch
      %23 = sbr.rel (%p21) target = $region8
    $region5: #{tpu_custom_call.1} parent=1 // loop_body
      %s25 = ssub.s32 %s20, 1
      %s26 = ssub.s32 %s20, 2
      %s27 = sadd.s32 %s20, 1
      %s28 = ssub.s32 %s20, %s27
      %p29 = scmp.eq.s32.totalorder %s28, 0
      %s31 = sadd.s32 %s30, 1
      %s32 = scalar_select %p29, %s30, %s31
      %p35 = pneg %p29
      %p36 = scmp.eq.s32.totalorder %s20, 1
      %p37 = por %p35, %p36
      %p38 = scmp.ne.s32.totalorder %s30, %s33
      %p39 = scmp.eq.s32.totalorder %s20, 0
      %p40 = por %p38, %p39
      %p41 = scmp.ne.s32.totalorder %s30, %s33
      %p42 = scmp.eq.s32.totalorder %s25, 1
      %p43 = por %p41, %p42
      %p44 = scmp.ne.s32.totalorder %s33, %s34
      %p45 = scmp.eq.s32.totalorder %s25, 0
      %p46 = por %p44, %p45
      %p47 = scmp.ne.s32.totalorder %s33, %s34
      %p48 = scmp.eq.s32.totalorder %s26, 1
      %p49 = por %p47, %p48
      %p51 = scmp.ne.s32.totalorder %s34, %s50
      %p52 = scmp.eq.s32.totalorder %s26, 0
      %p53 = por %p51, %p52
      %s54 = ssub.s32 %s20, %s27
      %p55 = scmp.eq.s32.totalorder %s54, 0
      %s57 = sadd.s32 %s56, 1
      %s58 = scalar_select %p55, %s56, %s57
      %p61 = pneg %p55
      %p62 = scmp.eq.s32.totalorder %s20, 1
      %p63 = por %p61, %p62
      %p64 = scmp.ne.s32.totalorder %s56, %s59
      %p65 = scmp.eq.s32.totalorder %s20, 0
      %p66 = por %p64, %p65
      %p67 = scmp.ne.s32.totalorder %s56, %s59
      %p68 = scmp.eq.s32.totalorder %s25, 1
      %p69 = por %p67, %p68
      %p70 = scmp.ne.s32.totalorder %s59, %s60
      %p71 = scmp.eq.s32.totalorder %s25, 0
      %p72 = por %p70, %p71
      %p73 = scmp.ne.s32.totalorder %s59, %s60
      %p74 = scmp.eq.s32.totalorder %s26, 1
      %p75 = por %p73, %p74
      %p77 = scmp.ne.s32.totalorder %s60, %s76
      %p78 = scmp.eq.s32.totalorder %s26, 0
      %p79 = por %p77, %p78
      %s81 = sadd.s32 %s80, 1
      %p84 = scmp.eq.s32.totalorder %s20, 1
      %p85 = scmp.ne.s32.totalorder %s80, %s82
      %p86 = scmp.eq.s32.totalorder %s20, 0
      %p87 = por %p85, %p86
      %p88 = scmp.ne.s32.totalorder %s80, %s82
      %p89 = scmp.eq.s32.totalorder %s25, 1
      %p90 = por %p88, %p89
      %p91 = scmp.ne.s32.totalorder %s82, %s83
      %p92 = scmp.eq.s32.totalorder %s25, 0
      %p93 = por %p91, %p92
      %p94 = scmp.ne.s32.totalorder %s82, %s83
      %p95 = scmp.eq.s32.totalorder %s26, 1
      %p96 = por %p94, %p95
      %p98 = scmp.ne.s32.totalorder %s83, %s97
      %p99 = scmp.eq.s32.totalorder %s26, 0
      %p100 = por %p98, %p99
      %s102 = sadd.s32 %s101, 1
      %p105 = scmp.eq.s32.totalorder %s20, 1
      %p106 = scmp.ne.s32.totalorder %s101, %s103
      %p107 = scmp.eq.s32.totalorder %s20, 0
      %p108 = por %p106, %p107
      %p109 = scmp.ne.s32.totalorder %s101, %s103
      %p110 = scmp.eq.s32.totalorder %s25, 1
      %p111 = por %p109, %p110
      %p112 = scmp.ne.s32.totalorder %s103, %s104
      %p113 = scmp.eq.s32.totalorder %s25, 0
      %p114 = por %p112, %p113
      %p115 = scmp.ne.s32.totalorder %s103, %s104
      %p116 = scmp.eq.s32.totalorder %s26, 1
      %p117 = por %p115, %p116
      %p119 = scmp.ne.s32.totalorder %s104, %s118
      %p120 = scmp.eq.s32.totalorder %s26, 0
      %p121 = por %p119, %p120
      %s123 = sadd.s32 %s122, 1
      %p126 = scmp.eq.s32.totalorder %s20, 1
      %p127 = scmp.ne.s32.totalorder %s122, %s124
      %p128 = scmp.eq.s32.totalorder %s20, 0
      %p129 = por %p127, %p128
      %p130 = scmp.ne.s32.totalorder %s122, %s124
      %p131 = scmp.eq.s32.totalorder %s25, 1
      %p132 = por %p130, %p131
      %p133 = scmp.ne.s32.totalorder %s124, %s125
      %p134 = scmp.eq.s32.totalorder %s25, 0
      %p135 = por %p133, %p134
      %p136 = scmp.ne.s32.totalorder %s124, %s125
      %p137 = scmp.eq.s32.totalorder %s26, 1
      %p138 = por %p136, %p137
      %p140 = scmp.ne.s32.totalorder %s125, %s139
      %p141 = scmp.eq.s32.totalorder %s26, 0
      %p142 = por %p140, %p141
      %s144 = sadd.s32 %s143, 1
      %p147 = scmp.eq.s32.totalorder %s20, 1
      %p148 = scmp.ne.s32.totalorder %s143, %s145
      %p149 = scmp.eq.s32.totalorder %s20, 0
      %p150 = por %p148, %p149
      %p151 = scmp.ne.s32.totalorder %s143, %s145
      %p152 = scmp.eq.s32.totalorder %s25, 1
      %p153 = por %p151, %p152
      %p154 = scmp.ne.s32.totalorder %s145, %s146
      %p155 = scmp.eq.s32.totalorder %s25, 0
      %p156 = por %p154, %p155
      %p157 = scmp.ne.s32.totalorder %s145, %s146
      %p158 = scmp.eq.s32.totalorder %s26, 1
      %p159 = por %p157, %p158
      %p161 = scmp.ne.s32.totalorder %s146, %s160
      %p162 = scmp.eq.s32.totalorder %s26, 0
      %p163 = por %p161, %p162
      %s165 = sadd.s32 %s164, 1
      %p168 = scmp.eq.s32.totalorder %s20, 1
      %p169 = scmp.ne.s32.totalorder %s164, %s166
      %p170 = scmp.eq.s32.totalorder %s20, 0
      %p171 = por %p169, %p170
      %p172 = scmp.ne.s32.totalorder %s164, %s166
      %p173 = scmp.eq.s32.totalorder %s25, 1
      %p174 = por %p172, %p173
      %p175 = scmp.ne.s32.totalorder %s166, %s167
      %p176 = scmp.eq.s32.totalorder %s25, 0
      %p177 = por %p175, %p176
      %p178 = scmp.ne.s32.totalorder %s166, %s167
      %p179 = scmp.eq.s32.totalorder %s26, 1
      %p180 = por %p178, %p179
      %p182 = scmp.ne.s32.totalorder %s167, %s181
      %p183 = scmp.eq.s32.totalorder %s26, 0
      %p184 = por %p182, %p183
      %s186 = sadd.s32 %s185, 1
      %p189 = scmp.eq.s32.totalorder %s20, 1
      %p190 = scmp.ne.s32.totalorder %s185, %s187
      %p191 = scmp.eq.s32.totalorder %s20, 0
      %p192 = por %p190, %p191
      %p193 = scmp.ne.s32.totalorder %s185, %s187
      %p194 = scmp.eq.s32.totalorder %s25, 1
      %p195 = por %p193, %p194
      %p196 = scmp.ne.s32.totalorder %s187, %s188
      %p197 = scmp.eq.s32.totalorder %s25, 0
      %p198 = por %p196, %p197
      %p199 = scmp.ne.s32.totalorder %s187, %s188
      %p200 = scmp.eq.s32.totalorder %s26, 1
      %p201 = por %p199, %p200
      %p203 = scmp.ne.s32.totalorder %s188, %s202
      %p204 = scmp.eq.s32.totalorder %s26, 0
      %p205 = por %p203, %p204
      %s206 = ssub.s32 %s20, %s27
      %p207 = scmp.eq.s32.totalorder %s206, 0
      %s209 = sadd.s32 %s208, 1
      %s210 = scalar_select %p207, %s208, %s209
      %p213 = pneg %p207
      %p214 = scmp.eq.s32.totalorder %s20, 1
      %p215 = por %p213, %p214
      %p216 = scmp.ne.s32.totalorder %s208, %s211
      %p217 = scmp.eq.s32.totalorder %s20, 0
      %p218 = por %p216, %p217
      %p219 = scmp.ne.s32.totalorder %s208, %s211
      %p220 = scmp.eq.s32.totalorder %s25, 1
      %p221 = por %p219, %p220
      %p222 = scmp.ne.s32.totalorder %s211, %s212
      %p223 = scmp.eq.s32.totalorder %s25, 0
      %p224 = por %p222, %p223
      %p225 = scmp.ne.s32.totalorder %s211, %s212
      %p226 = scmp.eq.s32.totalorder %s26, 1
      %p227 = por %p225, %p226
      %p229 = scmp.ne.s32.totalorder %s212, %s228
      %p230 = scmp.eq.s32.totalorder %s26, 0
      %p231 = por %p229, %p230
      %p232 = scmp.le.s32.totalorder 1, %s20
      %p233 = scmp.lt.s32.totalorder %s20, 3
      %p234 = pnand %p232, %p233
      %p235 = pneg %p234
      // Predicated region
      $region9: #{tpu_custom_call.1} parent=5 // pred_check
        _
      $region10: #{tpu_custom_call.1} parent=5 // pred_check_branch
        %237 = sbr.rel (%p234) target = $region12
      $region11: #{tpu_custom_call.1} parent=5 // pred_region
        %s238 = ssub.s32 %s20, 1
        // Predicated region
        $region13: #{tpu_custom_call.1} parent=11 // pred_check
          %p239 = pneg %p93
        $region14: #{tpu_custom_call.1} parent=11 // pred_check_branch
          %241 = sbr.rel (%p239) target = $region16
        $region15: #{tpu_custom_call.1} parent=11 // pred_region
          %243 = vsyncadd [#allocation3], 0
          %s245 = sshll.u32 %s2, 4
          %s246 = int_to_ptr.hbm [resolvable:$true] %s245
          %s247 = sshll.u32 [#allocation2], 4
          %s248 = int_to_ptr.vmem [resolvable:$true] %s247
          %250 = dma.hbm_to_vmem [thread:$0]  %s246, 128, %s248, [#allocation3]
        $region16: #{tpu_custom_call.1} parent=11 // pred_fallthru
          _
        // Predicated region
        $region17: #{tpu_custom_call.1} parent=11 // pred_check
          %p251 = pneg %p114
        $region18: #{tpu_custom_call.1} parent=11 // pred_check_branch
          %253 = sbr.rel (%p251) target = $region20
        $region19: #{tpu_custom_call.1} parent=11 // pred_region
          _
        $region20: #{tpu_custom_call.1} parent=11 // pred_fallthru
          _
        // Predicated region
        $region21: #{tpu_custom_call.1} parent=11 // pred_check
          %p254 = pneg %p135
        $region22: #{tpu_custom_call.1} parent=11 // pred_check_branch
          %256 = sbr.rel (%p254) target = $region24
        $region23: #{tpu_custom_call.1} parent=11 // pred_region
          %258 = vsyncadd [#allocation6], 0
          %s259 = sshll.u32 %s4, 4
          %s260 = int_to_ptr.hbm [resolvable:$true] %s259
          %s261 = sshll.u32 [#allocation5], 4
          %s262 = int_to_ptr.vmem [resolvable:$true] %s261
          %267 = dma.hbm_to_vmem [thread:$0]  %s260, 1024, %s262, [#allocation6], 64, 64, 4
        $region24: #{tpu_custom_call.1} parent=11 // pred_fallthru
          _
        // Predicated region
        $region25: #{tpu_custom_call.1} parent=11 // pred_check
          %p268 = pneg %p156
        $region26: #{tpu_custom_call.1} parent=11 // pred_check_branch
          %270 = sbr.rel (%p268) target = $region28
        $region27: #{tpu_custom_call.1} parent=11 // pred_region
          %272 = vsyncadd [#allocation6], 0
          %s273 = sshll.u32 %s5, 4
          %s274 = int_to_ptr.hbm [resolvable:$true] %s273
          %s275 = sshll.u32 [#allocation7], 4
          %s276 = int_to_ptr.vmem [resolvable:$true] %s275
          %281 = dma.hbm_to_vmem [thread:$0]  %s274, 1024, %s276, [#allocation6], 64, 64, 4
        $region28: #{tpu_custom_call.1} parent=11 // pred_fallthru
          _
        // Predicated region
        $region29: #{tpu_custom_call.1} parent=11 // pred_check
          %p282 = pneg %p177
        $region30: #{tpu_custom_call.1} parent=11 // pred_check_branch
          %284 = sbr.rel (%p282) target = $region32
        $region31: #{tpu_custom_call.1} parent=11 // pred_region
          %286 = vsyncadd [#allocation9], 0
          %s287 = sshll.u32 %s6, 4
          %s288 = int_to_ptr.hbm [resolvable:$true] %s287
          %s289 = sshll.u32 [#allocation8], 4
          %s290 = int_to_ptr.vmem [resolvable:$true] %s289
          %295 = dma.hbm_to_vmem [thread:$0]  %s288, 1024, %s290, [#allocation9], 64, 64, 4
        $region32: #{tpu_custom_call.1} parent=11 // pred_fallthru
          _
        // Predicated region
        $region33: #{tpu_custom_call.1} parent=11 // pred_check
          %p296 = pneg %p198
        $region34: #{tpu_custom_call.1} parent=11 // pred_check_branch
          %298 = sbr.rel (%p296) target = $region36
        $region35: #{tpu_custom_call.1} parent=11 // pred_region
          _
        $region36: #{tpu_custom_call.1} parent=11 // pred_fallthru
          _
      $region12: #{tpu_custom_call.1} parent=5 // pred_fallthru
        _
      %p299 = scmp.lt.s32.totalorder %s20, 2
      // Predicated region
      $region37: #{tpu_custom_call.1} parent=5 // pred_check
        %p300 = pneg %p299
      $region38: #{tpu_custom_call.1} parent=5 // pred_check_branch
        %302 = sbr.rel (%p300) target = $region40
      $region39: #{tpu_custom_call.1} parent=5 // pred_region
        // Predicated region
        $region41: #{tpu_custom_call.1} parent=39 // pred_check
          %p303 = pneg %p40
        $region42: #{tpu_custom_call.1} parent=39 // pred_check_branch
          %305 = sbr.rel (%p303) target = $region44
        $region43: #{tpu_custom_call.1} parent=39 // pred_region
          %s306 = smul.u32 4, %s20
          %p307 = scmp.lt.s32.totalorder %s306, 7
          %s308 = scalar_select %p307, %s306, 7
          %s309 = smul.addr %s308, 4
          %s310 = scalar_lea.vmem %s0, %s309
          %s311 = smul.u32 4, %s20
        $region44: #{tpu_custom_call.1} parent=39 // pred_fallthru
          _
        // Predicated region
        $region45: #{tpu_custom_call.1} parent=39 // pred_check
          %p312 = pneg %p66
        $region46: #{tpu_custom_call.1} parent=39 // pred_check_branch
          %314 = sbr.rel (%p312) target = $region48
        $region47: #{tpu_custom_call.1} parent=39 // pred_region
          %s315 = smul.u32 4, %s20
          %p316 = scmp.lt.s32.totalorder %s315, 7
          %s317 = scalar_select %p316, %s315, 7
          %s318 = smul.addr %s317, 4
          %s319 = scalar_lea.vmem %s1, %s318
          %s320 = smul.u32 4, %s20
        $region48: #{tpu_custom_call.1} parent=39 // pred_fallthru
          _
      $region40: #{tpu_custom_call.1} parent=5 // pred_fallthru
        _
      %p321 = scmp.le.s32.totalorder 1, %s20
      %p322 = scmp.lt.s32.totalorder %s20, 3
      %p323 = pnand %p321, %p322
      %p324 = pneg %p323
      // Predicated region
      $region49: #{tpu_custom_call.1} parent=5 // pred_check
        _
      $region50: #{tpu_custom_call.1} parent=5 // pred_check_branch
        %326 = sbr.rel (%p323) target = $region52
      $region51: #{tpu_custom_call.1} parent=5 // pred_region
        %s327 = ssub.s32 %s20, 1
        // Predicated region
        $region53: #{tpu_custom_call.1} parent=51 // pred_check
          %p328 = pneg %p93
        $region54: #{tpu_custom_call.1} parent=51 // pred_check_branch
          %330 = sbr.rel (%p328) target = $region56
        $region55: #{tpu_custom_call.1} parent=51 // pred_region
          %332 = dma.done [#allocation3], 128
        $region56: #{tpu_custom_call.1} parent=51 // pred_fallthru
          _
        // Predicated region
        $region57: #{tpu_custom_call.1} parent=51 // pred_check
          %p333 = pneg %p135
        $region58: #{tpu_custom_call.1} parent=51 // pred_check_branch
          %335 = sbr.rel (%p333) target = $region60
        $region59: #{tpu_custom_call.1} parent=51 // pred_region
          %337 = dma.done [#allocation6], 1024
        $region60: #{tpu_custom_call.1} parent=51 // pred_fallthru
          _
        // Predicated region
        $region61: #{tpu_custom_call.1} parent=51 // pred_check
          %p338 = pneg %p156
        $region62: #{tpu_custom_call.1} parent=51 // pred_check_branch
          %340 = sbr.rel (%p338) target = $region64
        $region63: #{tpu_custom_call.1} parent=51 // pred_region
          %342 = dma.done [#allocation6], 1024
        $region64: #{tpu_custom_call.1} parent=51 // pred_fallthru
          _
        // Predicated region
        $region65: #{tpu_custom_call.1} parent=51 // pred_check
          %p343 = pneg %p177
        $region66: #{tpu_custom_call.1} parent=51 // pred_check_branch
          %345 = sbr.rel (%p343) target = $region68
        $region67: #{tpu_custom_call.1} parent=51 // pred_region
          %347 = dma.done [#allocation9], 1024
        $region68: #{tpu_custom_call.1} parent=51 // pred_fallthru
          _
        %s348 = smul.u32 4, %s25
        %p349 = scmp.lt.s32.totalorder %s348, 7
        %s350 = scalar_select %p349, %s348, 7
        %s351 = smul.addr %s350, 4
        %s352 = scalar_lea.vmem %s0, %s351
        %p353 = pneg %p46
        %p354 = pneg %p43
        %s355 = smul.u32 4, %s25
        %p356 = scmp.lt.s32.totalorder %s355, 7
        %s357 = scalar_select %p356, %s355, 7
        %s358 = smul.addr %s357, 4
        %s359 = scalar_lea.vmem %s1, %s358
        %p360 = pneg %p72
        %p361 = pneg %p69
        %p362 = pneg %p93
        %p363 = pneg %p90
        %p364 = pneg %p114
        %p365 = pneg %p111
        %p366 = pneg %p135
        %p367 = pneg %p132
        %p368 = pneg %p156
        %p369 = pneg %p153
        %p370 = pneg %p177
        %p371 = pneg %p174
        %p372 = pneg %p198
        %p373 = pneg %p195
        %p374 = pneg %p224
        %p375 = pneg %p221
        %s376 = sand.u32 %s211, 1
        %s377 = scalar_lea.sflag [#allocation4], %s376
        %s378 = sand.u32 %s211, 1
        %s379 = smul.addr %s378, 32
        %s380 = scalar_lea.vmem [#allocation10], %s379
        %s381 = smul.u32 4, %s25
        %p382 = scmp.lt.s32.totalorder %s381, 7
        %s383 = scalar_select %p382, %s381, 7
        %s384 = smul.addr %s383, 4
        %s385 = scalar_lea.vmem %s0, %s384
        %s386 = smul.u32 4, %s25
        %s387 = smul.u32 4, %s25
        %p388 = scmp.lt.s32.totalorder %s387, 7
        %s389 = scalar_select %p388, %s387, 7
        %s390 = smul.addr %s389, 4
        %s391 = scalar_lea.vmem %s1, %s390
        %s392 = smul.u32 4, %s25
        %s393 = smul.u32 4, %s25
        %v395 = vld [vmem:[%s385] sm:$0xf]
        %v396 = vld [vmem:[%s385 + $0x4] sm:$0xf]
        %v397 = vld [vmem:[%s385 + $0x8] sm:$0xf]
        %v398 = vld [vmem:[%s385 + $0xc] sm:$0xf]
        %v399 = vld [vmem:[%s391] sm:$0xf]
        %v400 = vld [vmem:[%s391 + $0x4] sm:$0xf]
        %v401 = vld [vmem:[%s391 + $0x8] sm:$0xf]
        %v402 = vld [vmem:[%s391 + $0xc] sm:$0xf]
        %v403 = vld [vmem:[#allocation2] sm:$0xff]
        %v408 = vunpack.c.l.b16 %v399
        %v409 = vunpack.c.l.b16 %v400
        %v410 = vunpack.c.l.b16 %v401
        %v411 = vunpack.c.l.b16 %v402
        %v412 = vpack.c.b16 %v409, %v408
        %v413 = vpack.c.b16 %v411, %v410
        %v415 = vunpack.c.l.b16 %v403
        %v416 = vunpack.c.h.b16 %v403
        %v417 = vpack.c.b16 %v415, %v415
        %v418 = vpack.c.b16 %v416, %v416
        %vm419 = vcmask 64512
        %v421 = vsel %vm419, %v412, 0
        %v424 = vsel %vm419, %v413, 0
        %vm426 = vcmask 1043456
        %v428 = vsel %vm426, %v417, 0
        %v431 = vsel %vm426, %v418, 0
        %433 = vmatpush.bf16.msra.mxu0 0
        %434 = vmatpush.bf16.msra.mxu0 0
        %435 = vmatpush.bf16.msra.mxu0 0
        %436 = vmatpush.bf16.msra.mxu0 0
        %437 = vmatpush.bf16.msra.mxu0 0
        %438 = vmatpush.bf16.msra.mxu0 0
        %439 = vmatpush.bf16.msra.mxu0 0
        %440 = vmatpush.bf16.msra.mxu0 %v428
        %441 = vmatmul.bf16.gmra.mxu0 %v421
        %v442 = vpop.f32.mrf.mxu0
        %v443 = vadd.f32 0.0, %v442
        %v444 = vpop.f32.mrf.mxu0
        %v445 = vadd.f32 0.0, %v444
        %446 = vmatmul.bf16.gmra.mxu0 %v424
        %v447 = vpop.f32.mrf.mxu0
        %v448 = vadd.f32 0.0, %v447
        %v449 = vpop.f32.mrf.mxu0
        %v450 = vadd.f32 0.0, %v449
        %451 = vdwg.mxu0
        %452 = vmatpush.bf16.msra.mxu0 0
        %453 = vmatpush.bf16.msra.mxu0 0
        %454 = vmatpush.bf16.msra.mxu0 0
        %455 = vmatpush.bf16.msra.mxu0 0
        %456 = vmatpush.bf16.msra.mxu0 0
        %457 = vmatpush.bf16.msra.mxu0 0
        %458 = vmatpush.bf16.msra.mxu0 0
        %459 = vmatpush.bf16.msra.mxu0 %v431
        %460 = vmatmul.bf16.gmra.mxu0 %v421
        %v461 = vpop.f32.mrf.mxu0
        %v462 = vadd.f32 0.0, %v461
        %v463 = vpop.f32.mrf.mxu0
        %v464 = vadd.f32 0.0, %v463
        %465 = vmatmul.bf16.gmra.mxu0 %v424
        %v466 = vpop.f32.mrf.mxu0
        %v467 = vadd.f32 0.0, %v466
        %v468 = vpop.f32.mrf.mxu0
        %v469 = vadd.f32 0.0, %v468
        %470 = vdwg.mxu0
        %v471 = vlaneseq
        %v472 = vand.u32 %v471, 127
        %vm473 = vcmp.lt.s32.totalorder %v472, 32
        %v474 = vsel %vm473, 1, 0
        %v475 = vcvt.s32.f32 %v474
        %v476 = vld [vmem:[%s3] sm:$0x1]
        %v478 = vperm.slane %v476, 0
        %v480 = vadd.f32 %v478, %v443
        %v481 = vadd.f32 %v478, %v445
        %v482 = vadd.f32 %v478, %v448
        %v483 = vadd.f32 %v478, %v450
        %v484 = vld [vmem:[#allocation5] sm:$0xf]
        %v485 = vld [vmem:[#allocation5 + $0x4] sm:$0xf]
        %v486 = vld [vmem:[#allocation5 + $0x8] sm:$0xf]
        %v487 = vld [vmem:[#allocation5 + $0xc] sm:$0xf]
        %v488 = vld [vmem:[#allocation5 + $0x10] sm:$0xf]
        %v489 = vld [vmem:[#allocation5 + $0x14] sm:$0xf]
        %v490 = vld [vmem:[#allocation5 + $0x18] sm:$0xf]
        %v491 = vld [vmem:[#allocation5 + $0x1c] sm:$0xf]
        %v492 = vld [vmem:[#allocation5 + $0x20] sm:$0xf]
        %v493 = vld [vmem:[#allocation5 + $0x24] sm:$0xf]
        %v494 = vld [vmem:[#allocation5 + $0x28] sm:$0xf]
        %v495 = vld [vmem:[#allocation5 + $0x2c] sm:$0xf]
        %v496 = vld [vmem:[#allocation5 + $0x30] sm:$0xf]
        %v497 = vld [vmem:[#allocation5 + $0x34] sm:$0xf]
        %v498 = vld [vmem:[#allocation5 + $0x38] sm:$0xf]
        %v499 = vld [vmem:[#allocation5 + $0x3c] sm:$0xf]
        %v504 = vunpack.c.l.b16 %v395
        %v505 = vunpack.c.l.b16 %v396
        %v506 = vunpack.c.l.b16 %v397
        %v507 = vunpack.c.l.b16 %v398
        %v508 = vpack.c.b16 %v505, %v504
        %v509 = vpack.c.b16 %v507, %v506
        %v528 = vunpack.c.l.b16 %v484
        %v529 = vunpack.c.l.b16 %v485
        %v530 = vunpack.c.l.b16 %v486
        %v531 = vunpack.c.l.b16 %v487
        %v532 = vunpack.c.l.b16 %v488
        %v533 = vunpack.c.l.b16 %v489
        %v534 = vunpack.c.l.b16 %v490
        %v535 = vunpack.c.l.b16 %v491
        %v536 = vunpack.c.l.b16 %v492
        %v537 = vunpack.c.l.b16 %v493
        %v538 = vunpack.c.l.b16 %v494
        %v539 = vunpack.c.l.b16 %v495
        %v540 = vunpack.c.l.b16 %v496
        %v541 = vunpack.c.l.b16 %v497
        %v542 = vunpack.c.l.b16 %v498
        %v543 = vunpack.c.l.b16 %v499
        %v544 = vpack.c.b16 %v529, %v528
        %v545 = vpack.c.b16 %v531, %v530
        %v546 = vpack.c.b16 %v533, %v532
        %v547 = vpack.c.b16 %v535, %v534
        %v548 = vpack.c.b16 %v537, %v536
        %v549 = vpack.c.b16 %v539, %v538
        %v550 = vpack.c.b16 %v541, %v540
        %v551 = vpack.c.b16 %v543, %v542
        %560 = vmatpush.bf16.msra.mxu0 %v551
        %561 = vmatpush.bf16.msra.mxu0 %v550
        %562 = vmatpush.bf16.msra.mxu0 %v549
        %563 = vmatpush.bf16.msra.mxu0 %v548
        %564 = vmatpush.bf16.msra.mxu0 %v547
        %565 = vmatpush.bf16.msra.mxu0 %v546
        %566 = vmatpush.bf16.msra.mxu0 %v545
        %567 = vmatpush.bf16.msra.mxu0 %v544
        %568 = vmatmul.bf16.gmra.mxu0 %v508
        %v569 = vpop.f32.mrf.mxu0
        %v570 = vadd.f32 %v480, %v569
        %v571 = vpop.f32.mrf.mxu0
        %v572 = vadd.f32 %v481, %v571
        %573 = vmatmul.bf16.gmra.mxu0 %v509
        %v574 = vpop.f32.mrf.mxu0
        %v575 = vadd.f32 %v482, %v574
        %v576 = vpop.f32.mrf.mxu0
        %v577 = vadd.f32 %v483, %v576
        %578 = vdwg.mxu0
        %579 = vadd.xlane.f32.xlu0 %v570
        %v580 = vpop.xlane.xlu0 %579
        %581 = vadd.xlane.f32.xlu0 %v572
        %v582 = vpop.xlane.xlu0 %581
        %583 = vadd.xlane.f32.xlu0 %v575
        %v584 = vpop.xlane.xlu0 %583
        %585 = vadd.xlane.f32.xlu0 %v577
        %v586 = vpop.xlane.xlu0 %585
        %v587 = vmul.f32 %v580, 0.03125
        %v588 = vmul.f32 %v582, 0.03125
        %v589 = vmul.f32 %v584, 0.03125
        %v590 = vmul.f32 %v586, 0.03125
        %v591 = vsub.f32 %v570, %v587
        %v592 = vsub.f32 %v572, %v588
        %v593 = vsub.f32 %v575, %v589
        %v594 = vsub.f32 %v577, %v590
        %v595 = vmul.f32 %v591, %v475
        %v596 = vmul.f32 %v592, %v475
        %v597 = vmul.f32 %v593, %v475
        %v598 = vmul.f32 %v594, %v475
        %v599 = vmul.f32 %v595, %v595
        %v600 = vmul.f32 %v596, %v596
        %v601 = vmul.f32 %v597, %v597
        %v602 = vmul.f32 %v598, %v598
        %603 = vadd.xlane.f32.xlu0 %v599
        %v604 = vpop.xlane.xlu0 %603
        %605 = vadd.xlane.f32.xlu0 %v600
        %v606 = vpop.xlane.xlu0 %605
        %607 = vadd.xlane.f32.xlu0 %v601
        %v608 = vpop.xlane.xlu0 %607
        %609 = vadd.xlane.f32.xlu0 %v602
        %v610 = vpop.xlane.xlu0 %609
        %v611 = vmul.f32 %v604, 0.03125
        %v612 = vmul.f32 %v606, 0.03125
        %v613 = vmul.f32 %v608, 0.03125
        %v614 = vmul.f32 %v610, 0.03125
        %v615 = vadd.f32 %v611, 1e-05
        %v616 = vadd.f32 %v612, 1e-05
        %v617 = vadd.f32 %v613, 1e-05
        %v618 = vadd.f32 %v614, 1e-05
        %v619 = vrsqrt.pop %v615
        %v620 = vmul.f32 %v619, %v615
        %v621 = vmul.f32 %v620, %v619
        %v622 = vmul.f32 0.5, %v621
        %v623 = vsub.f32 1.5, %v622
        %v624 = vmul.f32 %v619, %v623
        %vm625 = vweird.f32 %v615
        %vm626 = vweird.f32 %v619
        %vm627 = vmor %vm625, %vm626
        %v628 = vsel %vm627, %v619, %v624
        %v629 = vrsqrt.pop %v616
        %v630 = vmul.f32 %v629, %v616
        %v631 = vmul.f32 %v630, %v629
        %v632 = vmul.f32 0.5, %v631
        %v633 = vsub.f32 1.5, %v632
        %v634 = vmul.f32 %v629, %v633
        %vm635 = vweird.f32 %v616
        %vm636 = vweird.f32 %v629
        %vm637 = vmor %vm635, %vm636
        %v638 = vsel %vm637, %v629, %v634
        %v639 = vrsqrt.pop %v617
        %v640 = vmul.f32 %v639, %v617
        %v641 = vmul.f32 %v640, %v639
        %v642 = vmul.f32 0.5, %v641
        %v643 = vsub.f32 1.5, %v642
        %v644 = vmul.f32 %v639, %v643
        %vm645 = vweird.f32 %v617
        %vm646 = vweird.f32 %v639
        %vm647 = vmor %vm645, %vm646
        %v648 = vsel %vm647, %v639, %v644
        %v649 = vrsqrt.pop %v618
        %v650 = vmul.f32 %v649, %v618
        %v651 = vmul.f32 %v650, %v649
        %v652 = vmul.f32 0.5, %v651
        %v653 = vsub.f32 1.5, %v652
        %v654 = vmul.f32 %v649, %v653
        %vm655 = vweird.f32 %v618
        %vm656 = vweird.f32 %v649
        %vm657 = vmor %vm655, %vm656
        %v658 = vsel %vm657, %v649, %v654
        %v659 = vmul.f32 %v595, %v628
        %v660 = vmul.f32 %v596, %v638
        %v661 = vmul.f32 %v597, %v648
        %v662 = vmul.f32 %v598, %v658
        %v663 = vmax.f32 %v659, 0.0
        %v664 = vmax.f32 %v660, 0.0
        %v665 = vmax.f32 %v661, 0.0
        %v666 = vmax.f32 %v662, 0.0
        %v667 = vpack.c.bf16 %v664, %v663
        %v668 = vpack.c.bf16 %v666, %v665
        %v669 = vld [vmem:[%s3 + $0x1] sm:$0x1]
        %v671 = vperm.slane %v669, 0
        %v673 = vadd.f32 %v671, %v462
        %v674 = vadd.f32 %v671, %v464
        %v675 = vadd.f32 %v671, %v467
        %v676 = vadd.f32 %v671, %v469
        %v677 = vld [vmem:[#allocation7] sm:$0xf]
        %v678 = vld [vmem:[#allocation7 + $0x4] sm:$0xf]
        %v679 = vld [vmem:[#allocation7 + $0x8] sm:$0xf]
        %v680 = vld [vmem:[#allocation7 + $0xc] sm:$0xf]
        %v681 = vld [vmem:[#allocation7 + $0x10] sm:$0xf]
        %v682 = vld [vmem:[#allocation7 + $0x14] sm:$0xf]
        %v683 = vld [vmem:[#allocation7 + $0x18] sm:$0xf]
        %v684 = vld [vmem:[#allocation7 + $0x1c] sm:$0xf]
        %v685 = vld [vmem:[#allocation7 + $0x20] sm:$0xf]
        %v686 = vld [vmem:[#allocation7 + $0x24] sm:$0xf]
        %v687 = vld [vmem:[#allocation7 + $0x28] sm:$0xf]
        %v688 = vld [vmem:[#allocation7 + $0x2c] sm:$0xf]
        %v689 = vld [vmem:[#allocation7 + $0x30] sm:$0xf]
        %v690 = vld [vmem:[#allocation7 + $0x34] sm:$0xf]
        %v691 = vld [vmem:[#allocation7 + $0x38] sm:$0xf]
        %v692 = vld [vmem:[#allocation7 + $0x3c] sm:$0xf]
        %v709 = vunpack.c.l.b16 %v677
        %v710 = vunpack.c.l.b16 %v678
        %v711 = vunpack.c.l.b16 %v679
        %v712 = vunpack.c.l.b16 %v680
        %v713 = vunpack.c.l.b16 %v681
        %v714 = vunpack.c.l.b16 %v682
        %v715 = vunpack.c.l.b16 %v683
        %v716 = vunpack.c.l.b16 %v684
        %v717 = vunpack.c.l.b16 %v685
        %v718 = vunpack.c.l.b16 %v686
        %v719 = vunpack.c.l.b16 %v687
        %v720 = vunpack.c.l.b16 %v688
        %v721 = vunpack.c.l.b16 %v689
        %v722 = vunpack.c.l.b16 %v690
        %v723 = vunpack.c.l.b16 %v691
        %v724 = vunpack.c.l.b16 %v692
        %v725 = vpack.c.b16 %v710, %v709
        %v726 = vpack.c.b16 %v712, %v711
        %v727 = vpack.c.b16 %v714, %v713
        %v728 = vpack.c.b16 %v716, %v715
        %v729 = vpack.c.b16 %v718, %v717
        %v730 = vpack.c.b16 %v720, %v719
        %v731 = vpack.c.b16 %v722, %v721
        %v732 = vpack.c.b16 %v724, %v723
        %741 = vmatpush.bf16.msra.mxu0 %v732
        %742 = vmatpush.bf16.msra.mxu0 %v731
        %743 = vmatpush.bf16.msra.mxu0 %v730
        %744 = vmatpush.bf16.msra.mxu0 %v729
        %745 = vmatpush.bf16.msra.mxu0 %v728
        %746 = vmatpush.bf16.msra.mxu0 %v727
        %747 = vmatpush.bf16.msra.mxu0 %v726
        %748 = vmatpush.bf16.msra.mxu0 %v725
        %749 = vmatmul.bf16.gmra.mxu0 %v667
        %v750 = vpop.f32.mrf.mxu0
        %v751 = vadd.f32 %v673, %v750
        %v752 = vpop.f32.mrf.mxu0
        %v753 = vadd.f32 %v674, %v752
        %754 = vmatmul.bf16.gmra.mxu0 %v668
        %v755 = vpop.f32.mrf.mxu0
        %v756 = vadd.f32 %v675, %v755
        %v757 = vpop.f32.mrf.mxu0
        %v758 = vadd.f32 %v676, %v757
        %759 = vdwg.mxu0
        %760 = vadd.xlane.f32.xlu0 %v751
        %v761 = vpop.xlane.xlu0 %760
        %762 = vadd.xlane.f32.xlu0 %v753
        %v763 = vpop.xlane.xlu0 %762
        %764 = vadd.xlane.f32.xlu0 %v756
        %v765 = vpop.xlane.xlu0 %764
        %766 = vadd.xlane.f32.xlu0 %v758
        %v767 = vpop.xlane.xlu0 %766
        %v768 = vmul.f32 %v761, 0.03125
        %v769 = vmul.f32 %v763, 0.03125
        %v770 = vmul.f32 %v765, 0.03125
        %v771 = vmul.f32 %v767, 0.03125
        %v772 = vsub.f32 %v751, %v768
        %v773 = vsub.f32 %v753, %v769
        %v774 = vsub.f32 %v756, %v770
        %v775 = vsub.f32 %v758, %v771
        %v776 = vmul.f32 %v772, %v475
        %v777 = vmul.f32 %v773, %v475
        %v778 = vmul.f32 %v774, %v475
        %v779 = vmul.f32 %v775, %v475
        %v780 = vmul.f32 %v776, %v776
        %v781 = vmul.f32 %v777, %v777
        %v782 = vmul.f32 %v778, %v778
        %v783 = vmul.f32 %v779, %v779
        %784 = vadd.xlane.f32.xlu0 %v780
        %v785 = vpop.xlane.xlu0 %784
        %786 = vadd.xlane.f32.xlu0 %v781
        %v787 = vpop.xlane.xlu0 %786
        %788 = vadd.xlane.f32.xlu0 %v782
        %v789 = vpop.xlane.xlu0 %788
        %790 = vadd.xlane.f32.xlu0 %v783
        %v791 = vpop.xlane.xlu0 %790
        %v792 = vmul.f32 %v785, 0.03125
        %v793 = vmul.f32 %v787, 0.03125
        %v794 = vmul.f32 %v789, 0.03125
        %v795 = vmul.f32 %v791, 0.03125
        %v796 = vadd.f32 %v792, 1e-05
        %v797 = vadd.f32 %v793, 1e-05
        %v798 = vadd.f32 %v794, 1e-05
        %v799 = vadd.f32 %v795, 1e-05
        %v800 = vrsqrt.pop %v796
        %v801 = vmul.f32 %v800, %v796
        %v802 = vmul.f32 %v801, %v800
        %v803 = vmul.f32 0.5, %v802
        %v804 = vsub.f32 1.5, %v803
        %v805 = vmul.f32 %v800, %v804
        %vm806 = vweird.f32 %v796
        %vm807 = vweird.f32 %v800
        %vm808 = vmor %vm806, %vm807
        %v809 = vsel %vm808, %v800, %v805
        %v810 = vrsqrt.pop %v797
        %v811 = vmul.f32 %v810, %v797
        %v812 = vmul.f32 %v811, %v810
        %v813 = vmul.f32 0.5, %v812
        %v814 = vsub.f32 1.5, %v813
        %v815 = vmul.f32 %v810, %v814
        %vm816 = vweird.f32 %v797
        %vm817 = vweird.f32 %v810
        %vm818 = vmor %vm816, %vm817
        %v819 = vsel %vm818, %v810, %v815
        %v820 = vrsqrt.pop %v798
        %v821 = vmul.f32 %v820, %v798
        %v822 = vmul.f32 %v821, %v820
        %v823 = vmul.f32 0.5, %v822
        %v824 = vsub.f32 1.5, %v823
        %v825 = vmul.f32 %v820, %v824
        %vm826 = vweird.f32 %v798
        %vm827 = vweird.f32 %v820
        %vm828 = vmor %vm826, %vm827
        %v829 = vsel %vm828, %v820, %v825
        %v830 = vrsqrt.pop %v799
        %v831 = vmul.f32 %v830, %v799
        %v832 = vmul.f32 %v831, %v830
        %v833 = vmul.f32 0.5, %v832
        %v834 = vsub.f32 1.5, %v833
        %v835 = vmul.f32 %v830, %v834
        %vm836 = vweird.f32 %v799
        %vm837 = vweird.f32 %v830
        %vm838 = vmor %vm836, %vm837
        %v839 = vsel %vm838, %v830, %v835
        %v840 = vmul.f32 %v776, %v809
        %v841 = vmul.f32 %v777, %v819
        %v842 = vmul.f32 %v778, %v829
        %v843 = vmul.f32 %v779, %v839
        %v844 = vmax.f32 %v840, 0.0
        %v845 = vmax.f32 %v841, 0.0
        %v846 = vmax.f32 %v842, 0.0
        %v847 = vmax.f32 %v843, 0.0
        %v848 = vpack.c.bf16 %v845, %v844
        %v849 = vpack.c.bf16 %v847, %v846
        %v850 = vld [vmem:[#allocation8] sm:$0xf]
        %v851 = vld [vmem:[#allocation8 + $0x4] sm:$0xf]
        %v852 = vld [vmem:[#allocation8 + $0x8] sm:$0xf]
        %v853 = vld [vmem:[#allocation8 + $0xc] sm:$0xf]
        %v854 = vld [vmem:[#allocation8 + $0x10] sm:$0xf]
        %v855 = vld [vmem:[#allocation8 + $0x14] sm:$0xf]
        %v856 = vld [vmem:[#allocation8 + $0x18] sm:$0xf]
        %v857 = vld [vmem:[#allocation8 + $0x1c] sm:$0xf]
        %v858 = vld [vmem:[#allocation8 + $0x20] sm:$0xf]
        %v859 = vld [vmem:[#allocation8 + $0x24] sm:$0xf]
        %v860 = vld [vmem:[#allocation8 + $0x28] sm:$0xf]
        %v861 = vld [vmem:[#allocation8 + $0x2c] sm:$0xf]
        %v862 = vld [vmem:[#allocation8 + $0x30] sm:$0xf]
        %v863 = vld [vmem:[#allocation8 + $0x34] sm:$0xf]
        %v864 = vld [vmem:[#allocation8 + $0x38] sm:$0xf]
        %v865 = vld [vmem:[#allocation8 + $0x3c] sm:$0xf]
        %v866 = vld [vmem:[%s7] sm:$0x1]
        %v868 = vperm.slane %v866, 0
        %v886 = vunpack.c.l.b16 %v850
        %v887 = vunpack.c.l.b16 %v851
        %v888 = vunpack.c.l.b16 %v852
        %v889 = vunpack.c.l.b16 %v853
        %v890 = vunpack.c.l.b16 %v854
        %v891 = vunpack.c.l.b16 %v855
        %v892 = vunpack.c.l.b16 %v856
        %v893 = vunpack.c.l.b16 %v857
        %v894 = vunpack.c.l.b16 %v858
        %v895 = vunpack.c.l.b16 %v859
        %v896 = vunpack.c.l.b16 %v860
        %v897 = vunpack.c.l.b16 %v861
        %v898 = vunpack.c.l.b16 %v862
        %v899 = vunpack.c.l.b16 %v863
        %v900 = vunpack.c.l.b16 %v864
        %v901 = vunpack.c.l.b16 %v865
        %v902 = vpack.c.b16 %v887, %v886
        %v903 = vpack.c.b16 %v889, %v888
        %v904 = vpack.c.b16 %v891, %v890
        %v905 = vpack.c.b16 %v893, %v892
        %v906 = vpack.c.b16 %v895, %v894
        %v907 = vpack.c.b16 %v897, %v896
        %v908 = vpack.c.b16 %v899, %v898
        %v909 = vpack.c.b16 %v901, %v900
        %918 = vmatpush.bf16.msra.mxu0 %v909
        %919 = vmatpush.bf16.msra.mxu0 %v908
        %920 = vmatpush.bf16.msra.mxu0 %v907
        %921 = vmatpush.bf16.msra.mxu0 %v906
        %922 = vmatpush.bf16.msra.mxu0 %v905
        %923 = vmatpush.bf16.msra.mxu0 %v904
        %924 = vmatpush.bf16.msra.mxu0 %v903
        %925 = vmatpush.bf16.msra.mxu0 %v902
        %926 = vmatmul.bf16.gmra.mxu0 %v848
        %v927 = vpop.f32.mrf.mxu0
        %v928 = vadd.f32 %v868, %v927
        %v929 = vpop.f32.mrf.mxu0
        %v930 = vadd.f32 %v868, %v929
        %931 = vmatmul.bf16.gmra.mxu0 %v849
        %v932 = vpop.f32.mrf.mxu0
        %v933 = vadd.f32 %v868, %v932
        %v934 = vpop.f32.mrf.mxu0
        %v935 = vadd.f32 %v868, %v934
        %936 = vdwg.mxu0
        %937 = vst [vmem:[%s380] sm:$0xff] %v928
        %938 = vst [vmem:[%s380 + $0x8] sm:$0xff] %v930
        %939 = vst [vmem:[%s380 + $0x10] sm:$0xff] %v933
        %940 = vst [vmem:[%s380 + $0x18] sm:$0xff] %v935
        %s941 = sand.u32 %s211, 1
        %s942 = scalar_lea.sflag [#allocation4], %s941
        %s943 = sand.u32 %s211, 1
        %s944 = smul.addr %s943, 32
        %s945 = scalar_lea.vmem [#allocation10], %s944
        // Predicated region
        $region69: #{tpu_custom_call.1} parent=51 // pred_check
          %p946 = pneg %p221
        $region70: #{tpu_custom_call.1} parent=51 // pred_check_branch
          %948 = sbr.rel (%p946) target = $region72
        $region71: #{tpu_custom_call.1} parent=51 // pred_region
          %s949 = smul.u32 4, %s25
          %951 = vsyncadd %s942, 0
          %s952 = smul.addr %s949, 8
          %s953 = scalar_lea.hbm %s8, %s952
          %s954 = sshll.u32 %s945, 4
          %s955 = int_to_ptr.vmem [resolvable:$true] %s954
          %s956 = sshll.u32 %s953, 4
          %s957 = int_to_ptr.hbm [resolvable:$true] %s956
          %962 = dma.vmem_to_hbm [thread:$0]  %s955, 512, %s957, %s942, 128, 128, 8
        $region72: #{tpu_custom_call.1} parent=51 // pred_fallthru
          _
      $region52: #{tpu_custom_call.1} parent=5 // pred_fallthru
        _
      %p963 = scmp.le.s32.totalorder 2, %s20
      // Predicated region
      $region73: #{tpu_custom_call.1} parent=5 // pred_check
        %p964 = pneg %p963
      $region74: #{tpu_custom_call.1} parent=5 // pred_check_branch
        %966 = sbr.rel (%p964) target = $region76
      $region75: #{tpu_custom_call.1} parent=5 // pred_region
        %s967 = ssub.s32 %s20, 2
        // Predicated region
        $region77: #{tpu_custom_call.1} parent=75 // pred_check
          %p968 = pneg %p227
        $region78: #{tpu_custom_call.1} parent=75 // pred_check_branch
          %970 = sbr.rel (%p968) target = $region80
        $region79: #{tpu_custom_call.1} parent=75 // pred_region
          %s971 = sand.u32 %s212, 1
          %s972 = scalar_lea.sflag [#allocation4], %s971
          %s973 = sand.u32 %s212, 1
          %s974 = smul.addr %s973, 32
          %s975 = scalar_lea.vmem [#allocation10], %s974
          %977 = dma.done %s972, 512
        $region80: #{tpu_custom_call.1} parent=75 // pred_fallthru
          _
      $region76: #{tpu_custom_call.1} parent=5 // pred_fallthru
        _
    $region6: #{tpu_custom_call.1} parent=1 // loop_footer
      %s24 = sadd.s32 1, %s20
    $region7: #{tpu_custom_call.1} parent=1 // loop_footer_branch
      %19 = sbr.rel target = $region3
    $region8: #{tpu_custom_call.1} parent=1 // loop_exit
      _
    %978 = vsyncpa [#allocation3], 1
    %s979 = scalar_lea.sflag [#allocation3], 1
    %980 = vsyncpa %s979, 1
    %981 = vsyncpa [#allocation6], 1
    %982 = vsyncpa [#allocation9], 1
    %983 = vsyncpa [#allocation4], 1
    %s984 = scalar_lea.sflag [#allocation4], 1
    %985 = vsyncpa %s984, 1

// kernel: tpu_custom_call.1
$region0: #{tpu_custom_call.1}
  #allocation0 [shape = 'u32[]', space=smem, size = 0x4, offset = 0x4, fixed_abs, tag = 'smem constant byte address 0x4 - core index']
  #allocation1 [shape = 'u32[72,128]{1,0:T(1,128)}', space=vmem, size = 0x9000, scoped, tag = 'internal scratch']
  %s0 = inlined_call_operand.vmem [shape: bf16[64,128], index: 0, kind: input, shape index: {}]
  %s1 = inlined_call_operand.vmem [shape: bf16[64,8], index: 1, kind: input, shape index: {}]
  %s2 = inlined_call_operand.hbm [shape: bf16[8,256], index: 2, kind: input, shape index: {}]
  %s3 = inlined_call_operand.vmem [shape: f32[1,256], index: 3, kind: input, shape index: {}]
  %s4 = inlined_call_operand.hbm [shape: bf16[128,128], index: 4, kind: input, shape index: {}]
  %s5 = inlined_call_operand.hbm [shape: bf16[128,128], index: 5, kind: input, shape index: {}]
  %s6 = inlined_call_operand.hbm [shape: bf16[128,128], index: 6, kind: input, shape index: {}]
  %s7 = inlined_call_operand.vmem [shape: f32[1,128], index: 7, kind: input, shape index: {}]
  %s8 = inlined_call_operand.hbm [shape: f32[64,128], index: 8, kind: output, shape index: {}]
  %s9 = sld [smem:[#allocation0]]
  $region81: #{tpu_custom_call.1} parent=0
    _
  %s11 = ssub.s32 1, %s9
  %s12 = scalar_select 0, %s11, %s9
  $region1: #{tpu_custom_call.1} parent=0
    #allocation2 [shape = 'u8[4096]{0}', space=vmem, size = 0x1000, scoped, tag = 'input window, operand 2, single buffered']
    #allocation3 [shape = 's32[2]{0}', space=sflag, size = 0x8, scoped, tag = 'scoped memory for tpu_custom_call.1']
    #allocation4 [shape = 's32[2]{0}', space=sflag, size = 0x8, scoped, tag = 'scoped memory for tpu_custom_call.1']
    #allocation5 [shape = 'u8[32768]{0}', space=vmem, size = 0x8000, scoped, tag = 'input window, operand 4, single buffered']
    #allocation6 [shape = 's32[1]{0}', space=sflag, size = 0x4, scoped, tag = 'scoped memory for tpu_custom_call.1']
    #allocation7 [shape = 'u8[32768]{0}', space=vmem, size = 0x8000, scoped, tag = 'input window, operand 5, single buffered']
    #allocation8 [shape = 'u8[32768]{0}', space=vmem, size = 0x8000, scoped, tag = 'input window, operand 6, single buffered']
    #allocation9 [shape = 's32[1]{0}', space=sflag, size = 0x4, scoped, tag = 'scoped memory for tpu_custom_call.1']
    #allocation10 [shape = 'u8[32768]{0}', space=vmem, size = 0x8000, scoped, tag = 'output window, operand 0']
    %13 = vsyncpa [#allocation3], 0
    %14 = vsyncpa [#allocation6], 0
    %15 = vsyncpa [#allocation9], 0
    %16 = vsyncpa [#allocation4], 0
    %s17 = scalar_lea.sflag [#allocation4], 1
    %18 = vsyncpa %s17, 0
    loop: start=0, step=1, limit=4
    $region2: #{tpu_custom_call.1} parent=1 // loop_pre_header
      _
    $region3: #{tpu_custom_call.1} parent=1 // loop_header
      %s20 = sphi 0, %s24
      %p21 = scmp.ge.s32.totalorder %s20, 4
      %s30 = sphi 0, %s32
      %s33 = sphi 0, %s30
      %s34 = sphi 0, %s33
      %s50 = sphi 0, %s34
      %s56 = sphi 0, %s58
      %s59 = sphi 0, %s56
      %s60 = sphi 0, %s59
      %s76 = sphi 0, %s60
      %s80 = sphi 0, %s80
      %s82 = sphi 0, %s80
      %s83 = sphi 0, %s82
      %s97 = sphi 0, %s83
      %s101 = sphi 0, %s101
      %s103 = sphi 0, %s101
      %s104 = sphi 0, %s103
      %s118 = sphi 0, %s104
      %s122 = sphi 0, %s122
      %s124 = sphi 0, %s122
      %s125 = sphi 0, %s124
      %s139 = sphi 0, %s125
      %s143 = sphi 0, %s143
      %s145 = sphi 0, %s143
      %s146 = sphi 0, %s145
      %s160 = sphi 0, %s146
      %s164 = sphi 0, %s164
      %s166 = sphi 0, %s164
      %s167 = sphi 0, %s166
      %s181 = sphi 0, %s167
      %s185 = sphi 0, %s185
      %s187 = sphi 0, %s185
      %s188 = sphi 0, %s187
      %s202 = sphi 0, %s188
      %s208 = sphi 0, %s210
      %s211 = sphi 0, %s208
      %s212 = sphi 0, %s211
      %s228 = sphi 0, %s212
    $region4: #{tpu_custom_call.1} parent=1 // loop_header_branch
      %23 = sbr.rel (%p21) target = $region8
    $region5: #{tpu_custom_call.1} parent=1 // loop_body
      %s25 = ssub.s32 %s20, 1
      %s26 = ssub.s32 %s20, 2
      %s27 = sadd.s32 %s20, 1
      %s28 = ssub.s32 %s20, %s27
      %p29 = scmp.eq.s32.totalorder %s28, 0
      %s31 = sadd.s32 %s30, 1
      %s32 = scalar_select %p29, %s30, %s31
      %p35 = pneg %p29
      %p36 = scmp.eq.s32.totalorder %s20, 1
      %p37 = por %p35, %p36
      %p38 = scmp.ne.s32.totalorder %s30, %s33
      %p39 = scmp.eq.s32.totalorder %s20, 0
      %p40 = por %p38, %p39
      %p41 = scmp.ne.s32.totalorder %s30, %s33
      %p42 = scmp.eq.s32.totalorder %s25, 1
      %p43 = por %p41, %p42
      %p44 = scmp.ne.s32.totalorder %s33, %s34
      %p45 = scmp.eq.s32.totalorder %s25, 0
      %p46 = por %p44, %p45
      %p47 = scmp.ne.s32.totalorder %s33, %s34
      %p48 = scmp.eq.s32.totalorder %s26, 1
      %p49 = por %p47, %p48
      %p51 = scmp.ne.s32.totalorder %s34, %s50
      %p52 = scmp.eq.s32.totalorder %s26, 0
      %p53 = por %p51, %p52
      %s54 = ssub.s32 %s20, %s27
      %p55 = scmp.eq.s32.totalorder %s54, 0
      %s57 = sadd.s32 %s56, 1
      %s58 = scalar_select %p55, %s56, %s57
      %p61 = pneg %p55
      %p62 = scmp.eq.s32.totalorder %s20, 1
      %p63 = por %p61, %p62
      %p64 = scmp.ne.s32.totalorder %s56, %s59
      %p65 = scmp.eq.s32.totalorder %s20, 0
      %p66 = por %p64, %p65
      %p67 = scmp.ne.s32.totalorder %s56, %s59
      %p68 = scmp.eq.s32.totalorder %s25, 1
      %p69 = por %p67, %p68
      %p70 = scmp.ne.s32.totalorder %s59, %s60
      %p71 = scmp.eq.s32.totalorder %s25, 0
      %p72 = por %p70, %p71
      %p73 = scmp.ne.s32.totalorder %s59, %s60
      %p74 = scmp.eq.s32.totalorder %s26, 1
      %p75 = por %p73, %p74
      %p77 = scmp.ne.s32.totalorder %s60, %s76
      %p78 = scmp.eq.s32.totalorder %s26, 0
      %p79 = por %p77, %p78
      %s81 = sadd.s32 %s80, 1
      %p84 = scmp.eq.s32.totalorder %s20, 1
      %p85 = scmp.ne.s32.totalorder %s80, %s82
      %p86 = scmp.eq.s32.totalorder %s20, 0
      %p87 = por %p85, %p86
      %p88 = scmp.ne.s32.totalorder %s80, %s82
      %p89 = scmp.eq.s32.totalorder %s25, 1
      %p90 = por %p88, %p89
      %p91 = scmp.ne.s32.totalorder %s82, %s83
      %p92 = scmp.eq.s32.totalorder %s25, 0
      %p93 = por %p91, %p92
      %p94 = scmp.ne.s32.totalorder %s82, %s83
      %p95 = scmp.eq.s32.totalorder %s26, 1
      %p96 = por %p94, %p95
      %p98 = scmp.ne.s32.totalorder %s83, %s97
      %p99 = scmp.eq.s32.totalorder %s26, 0
      %p100 = por %p98, %p99
      %s102 = sadd.s32 %s101, 1
      %p105 = scmp.eq.s32.totalorder %s20, 1
      %p106 = scmp.ne.s32.totalorder %s101, %s103
      %p107 = scmp.eq.s32.totalorder %s20, 0
      %p108 = por %p106, %p107
      %p109 = scmp.ne.s32.totalorder %s101, %s103
      %p110 = scmp.eq.s32.totalorder %s25, 1
      %p111 = por %p109, %p110
      %p112 = scmp.ne.s32.totalorder %s103, %s104
      %p113 = scmp.eq.s32.totalorder %s25, 0
      %p114 = por %p112, %p113
      %p115 = scmp.ne.s32.totalorder %s103, %s104
      %p116 = scmp.eq.s32.totalorder %s26, 1
      %p117 = por %p115, %p116
      %p119 = scmp.ne.s32.totalorder %s104, %s118
      %p120 = scmp.eq.s32.totalorder %s26, 0
      %p121 = por %p119, %p120
      %s123 = sadd.s32 %s122, 1
      %p126 = scmp.eq.s32.totalorder %s20, 1
      %p127 = scmp.ne.s32.totalorder %s122, %s124
      %p128 = scmp.eq.s32.totalorder %s20, 0
      %p129 = por %p127, %p128
      %p130 = scmp.ne.s32.totalorder %s122, %s124
      %p131 = scmp.eq.s32.totalorder %s25, 1
      %p132 = por %p130, %p131
      %p133 = scmp.ne.s32.totalorder %s124, %s125
      %p134 = scmp.eq.s32.totalorder %s25, 0
      %p135 = por %p133, %p134
      %p136 = scmp.ne.s32.totalorder %s124, %s125
      %p137 = scmp.eq.s32.totalorder %s26, 1
      %p138 = por %p136, %p137
      %p140 = scmp.ne.s32.totalorder %s125, %s139
      %p141 = scmp.eq.s32.totalorder %s26, 0
      %p142 = por %p140, %p141
      %s144 = sadd.s32 %s143, 1
      %p147 = scmp.eq.s32.totalorder %s20, 1
      %p148 = scmp.ne.s32.totalorder %s143, %s145
      %p149 = scmp.eq.s32.totalorder %s20, 0
      %p150 = por %p148, %p149
      %p151 = scmp.ne.s32.totalorder %s143, %s145
      %p152 = scmp.eq.s32.totalorder %s25, 1
      %p153 = por %p151, %p152
      %p154 = scmp.ne.s32.totalorder %s145, %s146
      %p155 = scmp.eq.s32.totalorder %s25, 0
      %p156 = por %p154, %p155
      %p157 = scmp.ne.s32.totalorder %s145, %s146
      %p158 = scmp.eq.s32.totalorder %s26, 1
      %p159 = por %p157, %p158
      %p161 = scmp.ne.s32.totalorder %s146, %s160
      %p162 = scmp.eq.s32.totalorder %s26, 0
      %p163 = por %p161, %p162
      %s165 = sadd.s32 %s164, 1
      %p168 = scmp.eq.s32.totalorder %s20, 1
      %p169 = scmp.ne.s32.totalorder %s164, %s166
      %p170 = scmp.eq.s32.totalorder %s20, 0
      %p171 = por %p169, %p170
      %p172 = scmp.ne.s32.totalorder %s164, %s166
      %p173 = scmp.eq.s32.totalorder %s25, 1
      %p174 = por %p172, %p173
      %p175 = scmp.ne.s32.totalorder %s166, %s167
      %p176 = scmp.eq.s32.totalorder %s25, 0
      %p177 = por %p175, %p176
      %p178 = scmp.ne.s32.totalorder %s166, %s167
      %p179 = scmp.eq.s32.totalorder %s26, 1
      %p180 = por %p178, %p179
      %p182 = scmp.ne.s32.totalorder %s167, %s181
      %p183 = scmp.eq.s32.totalorder %s26, 0
      %p184 = por %p182, %p183
      %s186 = sadd.s32 %s185, 1
      %p189 = scmp.eq.s32.totalorder %s20, 1
      %p190 = scmp.ne.s32.totalorder %s185, %s187
      %p191 = scmp.eq.s32.totalorder %s20, 0
      %p192 = por %p190, %p191
      %p193 = scmp.ne.s32.totalorder %s185, %s187
      %p194 = scmp.eq.s32.totalorder %s25, 1
      %p195 = por %p193, %p194
      %p196 = scmp.ne.s32.totalorder %s187, %s188
      %p197 = scmp.eq.s32.totalorder %s25, 0
      %p198 = por %p196, %p197
      %p199 = scmp.ne.s32.totalorder %s187, %s188
      %p200 = scmp.eq.s32.totalorder %s26, 1
      %p201 = por %p199, %p200
      %p203 = scmp.ne.s32.totalorder %s188, %s202
      %p204 = scmp.eq.s32.totalorder %s26, 0
      %p205 = por %p203, %p204
      %s206 = ssub.s32 %s20, %s27
      %p207 = scmp.eq.s32.totalorder %s206, 0
      %s209 = sadd.s32 %s208, 1
      %s210 = scalar_select %p207, %s208, %s209
      %p213 = pneg %p207
      %p214 = scmp.eq.s32.totalorder %s20, 1
      %p215 = por %p213, %p214
      %p216 = scmp.ne.s32.totalorder %s208, %s211
      %p217 = scmp.eq.s32.totalorder %s20, 0
      %p218 = por %p216, %p217
      %p219 = scmp.ne.s32.totalorder %s208, %s211
      %p220 = scmp.eq.s32.totalorder %s25, 1
      %p221 = por %p219, %p220
      %p222 = scmp.ne.s32.totalorder %s211, %s212
      %p223 = scmp.eq.s32.totalorder %s25, 0
      %p224 = por %p222, %p223
      %p225 = scmp.ne.s32.totalorder %s211, %s212
      %p226 = scmp.eq.s32.totalorder %s26, 1
      %p227 = por %p225, %p226
      %p229 = scmp.ne.s32.totalorder %s212, %s228
      %p230 = scmp.eq.s32.totalorder %s26, 0
      %p231 = por %p229, %p230
      %p232 = scmp.le.s32.totalorder 1, %s20
      %p233 = scmp.lt.s32.totalorder %s20, 3
      %p234 = pnand %p232, %p233
      %p235 = pneg %p234
      // Predicated region
      $region9: #{tpu_custom_call.1} parent=5 // pred_check
        _
      $region10: #{tpu_custom_call.1} parent=5 // pred_check_branch
        %237 = sbr.rel (%p234) target = $region12
      $region11: #{tpu_custom_call.1} parent=5 // pred_region
        %s238 = ssub.s32 %s20, 1
        // Predicated region
        $region13: #{tpu_custom_call.1} parent=11 // pred_check
          %p239 = pneg %p93
        $region14: #{tpu_custom_call.1} parent=11 // pred_check_branch
          %241 = sbr.rel (%p239) target = $region16
        $region15: #{tpu_custom_call.1} parent=11 // pred_region
          %243 = vsyncadd [#allocation3], 0
          %s245 = sshll.u32 %s2, 4
          %s246 = int_to_ptr.hbm [resolvable:$true] %s245
          %s247 = sshll.u32 [#allocation2], 4
          %s248 = int_to_ptr.vmem [resolvable:$true] %s247
          %250 = dma.hbm_to_vmem [thread:$0]  %s246, 128, %s248, [#allocation3]
        $region16: #{tpu_custom_call.1} parent=11 // pred_fallthru
          _
        // Predicated region
        $region17: #{tpu_custom_call.1} parent=11 // pred_check
          %p251 = pneg %p114
        $region18: #{tpu_custom_call.1} parent=11 // pred_check_branch
          %253 = sbr.rel (%p251) target = $region20
        $region19: #{tpu_custom_call.1} parent=11 // pred_region
          _
        $region20: #{tpu_custom_call.1} parent=11 // pred_fallthru
          _
        // Predicated region
        $region21: #{tpu_custom_call.1} parent=11 // pred_check
          %p254 = pneg %p135
        $region22: #{tpu_custom_call.1} parent=11 // pred_check_branch
          %256 = sbr.rel (%p254) target = $region24
        $region23: #{tpu_custom_call.1} parent=11 // pred_region
          %258 = vsyncadd [#allocation6], 0
          %s259 = sshll.u32 %s4, 4
          %s260 = int_to_ptr.hbm [resolvable:$true] %s259
          %s261 = sshll.u32 [#allocation5], 4
          %s262 = int_to_ptr.vmem [resolvable:$true] %s261
          %267 = dma.hbm_to_vmem [thread:$0]  %s260, 1024, %s262, [#allocation6], 64, 64, 4
        $region24: #{tpu_custom_call.1} parent=11 // pred_fallthru
          _
        // Predicated region
        $region25: #{tpu_custom_call.1} parent=11 // pred_check
          %p268 = pneg %p156
        $region26: #{tpu_custom_call.1} parent=11 // pred_check_branch
          %270 = sbr.rel (%p268) target = $region28
        $region27: #{tpu_custom_call.1} parent=11 // pred_region
          %272 = vsyncadd [#allocation6], 0
          %s273 = sshll.u32 %s5, 4
          %s274 = int_to_ptr.hbm [resolvable:$true] %s273
          %s275 = sshll.u32 [#allocation7], 4
          %s276 = int_to_ptr.vmem [resolvable:$true] %s275
          %281 = dma.hbm_to_vmem [thread:$0]  %s274, 1024, %s276, [#allocation6], 64, 64, 4
        $region28: #{tpu_custom_call.1} parent=11 // pred_fallthru
          _
        // Predicated region
        $region29: #{tpu_custom_call.1} parent=11 // pred_check
          %p282 = pneg %p177
        $region30: #{tpu_custom_call.1} parent=11 // pred_check_branch
          %284 = sbr.rel (%p282) target = $region32
        $region31: #{tpu_custom_call.1} parent=11 // pred_region
          %286 = vsyncadd [#allocation9], 0
          %s287 = sshll.u32 %s6, 4
          %s288 = int_to_ptr.hbm [resolvable:$true] %s287
          %s289 = sshll.u32 [#allocation8], 4
          %s290 = int_to_ptr.vmem [resolvable:$true] %s289
          %295 = dma.hbm_to_vmem [thread:$0]  %s288, 1024, %s290, [#allocation9], 64, 64, 4
        $region32: #{tpu_custom_call.1} parent=11 // pred_fallthru
          _
        // Predicated region
        $region33: #{tpu_custom_call.1} parent=11 // pred_check
          %p296 = pneg %p198
        $region34: #{tpu_custom_call.1} parent=11 // pred_check_branch
          %298 = sbr.rel (%p296) target = $region36
        $region35: #{tpu_custom_call.1} parent=11 // pred_region
          _
        $region36: #{tpu_custom_call.1} parent=11 // pred_fallthru
          _
      $region12: #{tpu_custom_call.1} parent=5 // pred_fallthru
        _
      %p299 = scmp.lt.s32.totalorder %s20, 2
      // Predicated region
      $region37: #{tpu_custom_call.1} parent=5 // pred_check
        %p300 = pneg %p299
      $region38: #{tpu_custom_call.1} parent=5 // pred_check_branch
        %302 = sbr.rel (%p300) target = $region40
      $region39: #{tpu_custom_call.1} parent=5 // pred_region
        // Predicated region
        $region41: #{tpu_custom_call.1} parent=39 // pred_check
          %p303 = pneg %p40
        $region42: #{tpu_custom_call.1} parent=39 // pred_check_branch
          %305 = sbr.rel (%p303) target = $region44
        $region43: #{tpu_custom_call.1} parent=39 // pred_region
          %s306 = smul.u32 4, %s20
          %p307 = scmp.lt.s32.totalorder %s306, 7
          %s308 = scalar_select %p307, %s306, 7
          %s309 = smul.addr %s308, 4
          %s310 = scalar_lea.vmem %s0, %s309
          %s311 = smul.u32 4, %s20
        $region44: #{tpu_custom_call.1} parent=39 // pred_fallthru
          _
        // Predicated region
        $region45: #{tpu_custom_call.1} parent=39 // pred_check
          %p312 = pneg %p66
        $region46: #{tpu_custom_call.1} parent=39 // pred_check_branch
          %314 = sbr.rel (%p312) target = $region48
        $region47: #{tpu_custom_call.1} parent=39 // pred_region
          %s315 = smul.u32 4, %s20
          %p316 = scmp.lt.s32.totalorder %s315, 7
          %s317 = scalar_select %p316, %s315, 7
          %s318 = smul.addr %s317, 4
          %s319 = scalar_lea.vmem %s1, %s318
          %s320 = smul.u32 4, %s20
        $region48: #{tpu_custom_call.1} parent=39 // pred_fallthru
          _
      $region40: #{tpu_custom_call.1} parent=5 // pred_fallthru
        _
      %p321 = scmp.le.s32.totalorder 1, %s20
      %p322 = scmp.lt.s32.totalorder %s20, 3
      %p323 = pnand %p321, %p322
      %p324 = pneg %p323
      // Predicated region
      $region49: #{tpu_custom_call.1} parent=5 // pred_check
        _
      $region50: #{tpu_custom_call.1} parent=5 // pred_check_branch
        %326 = sbr.rel (%p323) target = $region52
      $region51: #{tpu_custom_call.1} parent=5 // pred_region
        %s327 = ssub.s32 %s20, 1
        // Predicated region
        $region53: #{tpu_custom_call.1} parent=51 // pred_check
          %p328 = pneg %p93
        $region54: #{tpu_custom_call.1} parent=51 // pred_check_branch
          %330 = sbr.rel (%p328) target = $region56
        $region55: #{tpu_custom_call.1} parent=51 // pred_region
          %332 = dma.done [#allocation3], 128
        $region56: #{tpu_custom_call.1} parent=51 // pred_fallthru
          _
        // Predicated region
        $region57: #{tpu_custom_call.1} parent=51 // pred_check
          %p333 = pneg %p135
        $region58: #{tpu_custom_call.1} parent=51 // pred_check_branch
          %335 = sbr.rel (%p333) target = $region60
        $region59: #{tpu_custom_call.1} parent=51 // pred_region
          %337 = dma.done [#allocation6], 1024
        $region60: #{tpu_custom_call.1} parent=51 // pred_fallthru
          _
        // Predicated region
        $region61: #{tpu_custom_call.1} parent=51 // pred_check
          %p338 = pneg %p156
        $region62: #{tpu_custom_call.1} parent=51 // pred_check_branch
          %340 = sbr.rel (%p338) target = $region64
        $region63: #{tpu_custom_call.1} parent=51 // pred_region
          %342 = dma.done [#allocation6], 1024
        $region64: #{tpu_custom_call.1} parent=51 // pred_fallthru
          _
        // Predicated region
        $region65: #{tpu_custom_call.1} parent=51 // pred_check
          %p343 = pneg %p177
        $region66: #{tpu_custom_call.1} parent=51 // pred_check_branch
          %345 = sbr.rel (%p343) target = $region68
        $region67: #{tpu_custom_call.1} parent=51 // pred_region
          %347 = dma.done [#allocation9], 1024
        $region68: #{tpu_custom_call.1} parent=51 // pred_fallthru
          _
        %s348 = smul.u32 4, %s25
        %p349 = scmp.lt.s32.totalorder %s348, 7
        %s350 = scalar_select %p349, %s348, 7
        %s351 = smul.addr %s350, 4
        %s352 = scalar_lea.vmem %s0, %s351
        %p353 = pneg %p46
        %p354 = pneg %p43
        %s355 = smul.u32 4, %s25
        %p356 = scmp.lt.s32.totalorder %s355, 7
        %s357 = scalar_select %p356, %s355, 7
        %s358 = smul.addr %s357, 4
        %s359 = scalar_lea.vmem %s1, %s358
        %p360 = pneg %p72
        %p361 = pneg %p69
        %p362 = pneg %p93
        %p363 = pneg %p90
        %p364 = pneg %p114
        %p365 = pneg %p111
        %p366 = pneg %p135
        %p367 = pneg %p132
        %p368 = pneg %p156
        %p369 = pneg %p153
        %p370 = pneg %p177
        %p371 = pneg %p174
        %p372 = pneg %p198
        %p373 = pneg %p195
        %p374 = pneg %p224
        %p375 = pneg %p221
        %s376 = sand.u32 %s211, 1
        %s377 = scalar_lea.sflag [#allocation4], %s376
        %s378 = sand.u32 %s211, 1
        %s379 = smul.addr %s378, 32
        %s380 = scalar_lea.vmem [#allocation10], %s379
        %s381 = smul.u32 4, %s25
        %p382 = scmp.lt.s32.totalorder %s381, 7
        %s383 = scalar_select %p382, %s381, 7
        %s384 = smul.addr %s383, 4
        %s385 = scalar_lea.vmem %s0, %s384
        %s386 = smul.u32 4, %s25
        %s387 = smul.u32 4, %s25
        %p388 = scmp.lt.s32.totalorder %s387, 7
        %s389 = scalar_select %p388, %s387, 7
        %s390 = smul.addr %s389, 4
        %s391 = scalar_lea.vmem %s1, %s390
        %s392 = smul.u32 4, %s25
        %s393 = smul.u32 4, %s25
        %v395 = vld [vmem:[%s385] sm:$0xf]
        %v396 = vld [vmem:[%s385 + $0x4] sm:$0xf]
        %v397 = vld [vmem:[%s385 + $0x8] sm:$0xf]
        %v398 = vld [vmem:[%s385 + $0xc] sm:$0xf]
        %v399 = vld [vmem:[%s391] sm:$0xf]
        %v400 = vld [vmem:[%s391 + $0x4] sm:$0xf]
        %v401 = vld [vmem:[%s391 + $0x8] sm:$0xf]
        %v402 = vld [vmem:[%s391 + $0xc] sm:$0xf]
        %v403 = vld [vmem:[#allocation2] sm:$0xff]
        %v408 = vunpack.c.l.b16 %v399
        %v409 = vunpack.c.l.b16 %v400
        %v410 = vunpack.c.l.b16 %v401
        %v411 = vunpack.c.l.b16 %v402
        %v412 = vpack.c.b16 %v409, %v408
        %v413 = vpack.c.b16 %v411, %v410
        %v415 = vunpack.c.l.b16 %v403
        %v416 = vunpack.c.h.b16 %v403
        %v417 = vpack.c.b16 %v415, %v415
        %v418 = vpack.c.b16 %v416, %v416
        %vm419 = vcmask 64512
        %v421 = vsel %vm419, %v412, 0
        %v424 = vsel %vm419, %v413, 0
        %vm426 = vcmask 1043456
        %v428 = vsel %vm426, %v417, 0
        %v431 = vsel %vm426, %v418, 0
        %433 = vmatpush.bf16.msra.mxu0 0
        %434 = vmatpush.bf16.msra.mxu0 0
        %435 = vmatpush.bf16.msra.mxu0 0
        %436 = vmatpush.bf16.msra.mxu0 0
        %437 = vmatpush.bf16.msra.mxu0 0
        %438 = vmatpush.bf16.msra.mxu0 0
        %439 = vmatpush.bf16.msra.mxu0 0
        %440 = vmatpush.bf16.msra.mxu0 %v428
        %441 = vmatmul.bf16.gmra.mxu0 %v421
        %v442 = vpop.f32.mrf.mxu0
        %v443 = vadd.f32 0.0, %v442
        %v444 = vpop.f32.mrf.mxu0
        %v445 = vadd.f32 0.0, %v444
        %446 = vmatmul.bf16.gmra.mxu0 %v424
        %v447 = vpop.f32.mrf.mxu0
        %v448 = vadd.f32 0.0, %v447
        %v449 = vpop.f32.mrf.mxu0
        %v450 = vadd.f32 0.0, %v449
        %451 = vdwg.mxu0
        %452 = vmatpush.bf16.msra.mxu0 0
        %453 = vmatpush.bf16.msra.mxu0 0
        %454 = vmatpush.bf16.msra.mxu0 0
        %455 = vmatpush.bf16.msra.mxu0 0
        %456 = vmatpush.bf16.msra.mxu0 0
        %457 = vmatpush.bf16.msra.mxu0 0
        %458 = vmatpush.bf16.msra.mxu0 0
        %459 = vmatpush.bf16.msra.mxu0 %v431
        %460 = vmatmul.bf16.gmra.mxu0 %v421
        %v461 = vpop.f32.mrf.mxu0
        %v462 = vadd.f32 0.0, %v461
        %v463 = vpop.f32.mrf.mxu0
        %v464 = vadd.f32 0.0, %v463
        %465 = vmatmul.bf16.gmra.mxu0 %v424
        %v466 = vpop.f32.mrf.mxu0
        %v467 = vadd.f32 0.0, %v466
        %v468 = vpop.f32.mrf.mxu0
        %v469 = vadd.f32 0.0, %v468
        %470 = vdwg.mxu0
        %v471 = vlaneseq
        %v472 = vand.u32 %v471, 127
        %vm473 = vcmp.lt.s32.totalorder %v472, 32
        %v474 = vsel %vm473, 1, 0
        %v475 = vcvt.s32.f32 %v474
        %v476 = vld [vmem:[%s3] sm:$0x1]
        %v478 = vperm.slane %v476, 0
        %v480 = vadd.f32 %v478, %v443
        %v481 = vadd.f32 %v478, %v445
        %v482 = vadd.f32 %v478, %v448
        %v483 = vadd.f32 %v478, %v450
        %v484 = vld [vmem:[#allocation5] sm:$0xf]
        %v485 = vld [vmem:[#allocation5 + $0x4] sm:$0xf]
        %v486 = vld [vmem:[#allocation5 + $0x8] sm:$0xf]
        %v487 = vld [vmem:[#allocation5 + $0xc] sm:$0xf]
        %v488 = vld [vmem:[#allocation5 + $0x10] sm:$0xf]
        %v489 = vld [vmem:[#allocation5 + $0x14] sm:$0xf]
        %v490 = vld [vmem:[#allocation5 + $0x18] sm:$0xf]
        %v491 = vld [vmem:[#allocation5 + $0x1c] sm:$0xf]
        %v492 = vld [vmem:[#allocation5 + $0x20] sm:$0xf]
        %v493 = vld [vmem:[#allocation5 + $0x24] sm:$0xf]
        %v494 = vld [vmem:[#allocation5 + $0x28] sm:$0xf]
        %v495 = vld [vmem:[#allocation5 + $0x2c] sm:$0xf]
        %v496 = vld [vmem:[#allocation5 + $0x30] sm:$0xf]
        %v497 = vld [vmem:[#allocation5 + $0x34] sm:$0xf]
        %v498 = vld [vmem:[#allocation5 + $0x38] sm:$0xf]
        %v499 = vld [vmem:[#allocation5 + $0x3c] sm:$0xf]
        %v504 = vunpack.c.l.b16 %v395
        %v505 = vunpack.c.l.b16 %v396
        %v506 = vunpack.c.l.b16 %v397
        %v507 = vunpack.c.l.b16 %v398
        %v508 = vpack.c.b16 %v505, %v504
        %v509 = vpack.c.b16 %v507, %v506
        %v528 = vunpack.c.l.b16 %v484
        %v529 = vunpack.c.l.b16 %v485
        %v530 = vunpack.c.l.b16 %v486
        %v531 = vunpack.c.l.b16 %v487
        %v532 = vunpack.c.l.b16 %v488
        %v533 = vunpack.c.l.b16 %v489
        %v534 = vunpack.c.l.b16 %v490
        %v535 = vunpack.c.l.b16 %v491
        %v536 = vunpack.c.l.b16 %v492
        %v537 = vunpack.c.l.b16 %v493
        %v538 = vunpack.c.l.b16 %v494
        %v539 = vunpack.c.l.b16 %v495
        %v540 = vunpack.c.l.b16 %v496
        %v541 = vunpack.c.l.b16 %v497
        %v542 = vunpack.c.l.b16 %v498
        %v543 = vunpack.c.l.b16 %v499
        %v544 = vpack.c.b16 %v529, %v528
        %v545 = vpack.c.b16 %v531, %v530
        %v546 = vpack.c.b16 %v533, %v532
        %v547 = vpack.c.b16 %v535, %v534
        %v548 = vpack.c.b16 %v537, %v536
        %v549 = vpack.c.b16 %v539, %v538
        %v550 = vpack.c.b16 %v541, %v540
        %v551 = vpack.c.b16 %v543, %v542
        %560 = vmatpush.bf16.msra.mxu0 %v551
        %561 = vmatpush.bf16.msra.mxu0 %v550
        %562 = vmatpush.bf16.msra.mxu0 %v549
        %563 = vmatpush.bf16.msra.mxu0 %v548
        %564 = vmatpush.bf16.msra.mxu0 %v547
        %565 = vmatpush.bf16.msra.mxu0 %v546
        %566 = vmatpush.bf16.msra.mxu0 %v545
        %567 = vmatpush.bf16.msra.mxu0 %v544
        %568 = vmatmul.bf16.gmra.mxu0 %v508
        %v569 = vpop.f32.mrf.mxu0
        %v570 = vadd.f32 %v480, %v569
        %v571 = vpop.f32.mrf.mxu0
        %v572 = vadd.f32 %v481, %v571
        %573 = vmatmul.bf16.gmra.mxu0 %v509
        %v574 = vpop.f32.mrf.mxu0
        %v575 = vadd.f32 %v482, %v574
        %v576 = vpop.f32.mrf.mxu0
        %v577 = vadd.f32 %v483, %v576
        %578 = vdwg.mxu0
        %579 = vadd.xlane.f32.xlu0 %v570
        %v580 = vpop.xlane.xlu0 %579
        %581 = vadd.xlane.f32.xlu0 %v572
        %v582 = vpop.xlane.xlu0 %581
        %583 = vadd.xlane.f32.xlu0 %v575
        %v584 = vpop.xlane.xlu0 %583
        %585 = vadd.xlane.f32.xlu0 %v577
        %v586 = vpop.xlane.xlu0 %585
        %v587 = vmul.f32 %v580, 0.03125
        %v588 = vmul.f32 %v582, 0.03125
        %v589 = vmul.f32 %v584, 0.03125
        %v590 = vmul.f32 %v586, 0.03125
        %v591 = vsub.f32 %v570, %v587
        %v592 = vsub.f32 %v572, %v588
        %v593 = vsub.f32 %v575, %v589
        %v594 = vsub.f32 %v577, %v590
        %v595 = vmul.f32 %v591, %v475
        %v596 = vmul.f32 %v592, %v475
        %v597 = vmul.f32 %v593, %v475
        %v598 = vmul.f32 %v594, %v475
        %v599 = vmul.f32 %v595, %v595
        %v600 = vmul.f32 %v596, %v596
        %v601 = vmul.f32 %v597, %v597
        %v602 = vmul.f32 %v598, %v598
        %603 = vadd.xlane.f32.xlu0 %v599
        %v604 = vpop.xlane.xlu0 %603
        %605 = vadd.xlane.f32.xlu0 %v600
        %v606 = vpop.xlane.xlu0 %605
        %607 = vadd.xlane.f32.xlu0 %v601
        %v608 = vpop.xlane.xlu0 %607
        %609 = vadd.xlane.f32.xlu0 %v602
        %v610 = vpop.xlane.xlu0 %609
        %v611 = vmul.f32 %v604, 0.03125
        %v612 = vmul.f32 %v606, 0.03125
        %v613 = vmul.f32 %v608, 0.03125
        %v614 = vmul.f32 %v610, 0.03125
        %v615 = vadd.f32 %v611, 1e-05
        %v616 = vadd.f32 %v612, 1e-05
        %v617 = vadd.f32 %v613, 1e-05
        %v618 = vadd.f32 %v614, 1e-05
        %v619 = vrsqrt.pop %v615
        %v620 = vmul.f32 %v619, %v615
        %v621 = vmul.f32 %v620, %v619
        %v622 = vmul.f32 0.5, %v621
        %v623 = vsub.f32 1.5, %v622
        %v624 = vmul.f32 %v619, %v623
        %vm625 = vweird.f32 %v615
        %vm626 = vweird.f32 %v619
        %vm627 = vmor %vm625, %vm626
        %v628 = vsel %vm627, %v619, %v624
        %v629 = vrsqrt.pop %v616
        %v630 = vmul.f32 %v629, %v616
        %v631 = vmul.f32 %v630, %v629
        %v632 = vmul.f32 0.5, %v631
        %v633 = vsub.f32 1.5, %v632
        %v634 = vmul.f32 %v629, %v633
        %vm635 = vweird.f32 %v616
        %vm636 = vweird.f32 %v629
        %vm637 = vmor %vm635, %vm636
        %v638 = vsel %vm637, %v629, %v634
        %v639 = vrsqrt.pop %v617
        %v640 = vmul.f32 %v639, %v617
        %v641 = vmul.f32 %v640, %v639
        %v642 = vmul.f32 0.5, %v641
        %v643 = vsub.f32 1.5, %v642
        %v644 = vmul.f32 %v639, %v643
        %vm645 = vweird.f32 %v617
        %vm646 = vweird.f32 %v639
        %vm647 = vmor %vm645, %vm646
        %v648 = vsel %vm647, %v639, %v644
        %v649 = vrsqrt.pop %v618
        %v650 = vmul.f32 %v649, %v618
        %v651 = vmul.f32 %v650, %v649
        %v652 = vmul.f32 0.5, %v651
        %v653 = vsub.f32 1.5, %v652
        %v654 = vmul.f32 %v649, %v653
        %vm655 = vweird.f32 %v618
        %vm656 = vweird.f32 %v649
        %vm657 = vmor %vm655, %vm656
        %v658 = vsel %vm657, %v649, %v654
        %v659 = vmul.f32 %v595, %v628
        %v660 = vmul.f32 %v596, %v638
        %v661 = vmul.f32 %v597, %v648
        %v662 = vmul.f32 %v598, %v658
        %v663 = vmax.f32 %v659, 0.0
        %v664 = vmax.f32 %v660, 0.0
        %v665 = vmax.f32 %v661, 0.0
        %v666 = vmax.f32 %v662, 0.0
        %v667 = vpack.c.bf16 %v664, %v663
        %v668 = vpack.c.bf16 %v666, %v665
        %v669 = vld [vmem:[%s3 + $0x1] sm:$0x1]
        %v671 = vperm.slane %v669, 0
        %v673 = vadd.f32 %v671, %v462
        %v674 = vadd.f32 %v671, %v464
        %v675 = vadd.f32 %v671, %v467
        %v676 = vadd.f32 %v671, %v469
        %v677 = vld [vmem:[#allocation7] sm:$0xf]
        %v678 = vld [vmem:[#allocation7 + $0x4] sm:$0xf]
        %v679 = vld [vmem:[#allocation7 + $0x8] sm:$0xf]
        %v680 = vld [vmem:[#allocation7 + $0xc] sm:$0xf]
        %v681 = vld [vmem:[#allocation7 + $0x10] sm:$0xf]
        %v682 = vld [vmem:[#allocation7 + $0x14] sm:$0xf]
        %v683 = vld [vmem:[#allocation7 + $0x18] sm:$0xf]
        %v684 = vld [vmem:[#allocation7 + $0x1c] sm:$0xf]
        %v685 = vld [vmem:[#allocation7 + $0x20] sm:$0xf]
        %v686 = vld [vmem:[#allocation7 + $0x24] sm:$0xf]
        %v687 = vld [vmem:[#allocation7 + $0x28] sm:$0xf]
        %v688 = vld [vmem:[#allocation7 + $0x2c] sm:$0xf]
        %v689 = vld [vmem:[#allocation7 + $0x30] sm:$0xf]
        %v690 = vld [vmem:[#allocation7 + $0x34] sm:$0xf]
        %v691 = vld [vmem:[#allocation7 + $0x38] sm:$0xf]
        %v692 = vld [vmem:[#allocation7 + $0x3c] sm:$0xf]
        %v709 = vunpack.c.l.b16 %v677
        %v710 = vunpack.c.l.b16 %v678
        %v711 = vunpack.c.l.b16 %v679
        %v712 = vunpack.c.l.b16 %v680
        %v713 = vunpack.c.l.b16 %v681
        %v714 = vunpack.c.l.b16 %v682
        %v715 = vunpack.c.l.b16 %v683
        %v716 = vunpack.c.l.b16 %v684
        %v717 = vunpack.c.l.b16 %v685
        %v718 = vunpack.c.l.b16 %v686
        %v719 = vunpack.c.l.b16 %v687
        %v720 = vunpack.c.l.b16 %v688
        %v721 = vunpack.c.l.b16 %v689
        %v722 = vunpack.c.l.b16 %v690
        %v723 = vunpack.c.l.b16 %v691
        %v724 = vunpack.c.l.b16 %v692
        %v725 = vpack.c.b16 %v710, %v709
        %v726 = vpack.c.b16 %v712, %v711
        %v727 = vpack.c.b16 %v714, %v713
        %v728 = vpack.c.b16 %v716, %v715
        %v729 = vpack.c.b16 %v718, %v717
        %v730 = vpack.c.b16 %v720, %v719
        %v731 = vpack.c.b16 %v722, %v721
        %v732 = vpack.c.b16 %v724, %v723
        %741 = vmatpush.bf16.msra.mxu0 %v732
        %742 = vmatpush.bf16.msra.mxu0 %v731
        %743 = vmatpush.bf16.msra.mxu0 %v730
        %744 = vmatpush.bf16.msra.mxu0 %v729
        %745 = vmatpush.bf16.msra.mxu0 %v728
        %746 = vmatpush.bf16.msra.mxu0 %v727
        %747 = vmatpush.bf16.msra.mxu0 %v726
        %748 = vmatpush.bf16.msra.mxu0 %v725
        %749 = vmatmul.bf16.gmra.mxu0 %v667
        %v750 = vpop.f32.mrf.mxu0
        %v751 = vadd.f32 %v673, %v750
        %v752 = vpop.f32.mrf.mxu0
        %v753 = vadd.f32 %v674, %v752
        %754 = vmatmul.bf16.gmra.mxu0 %v668
        %v755 = vpop.f32.mrf.mxu0
        %v756 = vadd.f32 %v675, %v755
        %v757 = vpop.f32.mrf.mxu0
        %v758 = vadd.f32 %v676, %v757
        %759 = vdwg.mxu0
        %760 = vadd.xlane.f32.xlu0 %v751
        %v761 = vpop.xlane.xlu0 %760
        %762 = vadd.xlane.f32.xlu0 %v753
        %v763 = vpop.xlane.xlu0 %762
        %764 = vadd.xlane.f32.xlu0 %v756
        %v765 = vpop.xlane.xlu0 %764
        %766 = vadd.xlane.f32.xlu0 %v758
        %v767 = vpop.xlane.xlu0 %766
        %v768 = vmul.f32 %v761, 0.03125
        %v769 = vmul.f32 %v763, 0.03125
        %v770 = vmul.f32 %v765, 0.03125
        %v771 = vmul.f32 %v767, 0.03125
        %v772 = vsub.f32 %v751, %v768
        %v773 = vsub.f32 %v753, %v769
        %v774 = vsub.f32 %v756, %v770
        %v775 = vsub.f32 %v758, %v771
        %v776 = vmul.f32 %v772, %v475
        %v777 = vmul.f32 %v773, %v475
        %v778 = vmul.f32 %v774, %v475
        %v779 = vmul.f32 %v775, %v475
        %v780 = vmul.f32 %v776, %v776
        %v781 = vmul.f32 %v777, %v777
        %v782 = vmul.f32 %v778, %v778
        %v783 = vmul.f32 %v779, %v779
        %784 = vadd.xlane.f32.xlu0 %v780
        %v785 = vpop.xlane.xlu0 %784
        %786 = vadd.xlane.f32.xlu0 %v781
        %v787 = vpop.xlane.xlu0 %786
        %788 = vadd.xlane.f32.xlu0 %v782
        %v789 = vpop.xlane.xlu0 %788
        %790 = vadd.xlane.f32.xlu0 %v783
        %v791 = vpop.xlane.xlu0 %790
        %v792 = vmul.f32 %v785, 0.03125
        %v793 = vmul.f32 %v787, 0.03125
        %v794 = vmul.f32 %v789, 0.03125
        %v795 = vmul.f32 %v791, 0.03125
        %v796 = vadd.f32 %v792, 1e-05
        %v797 = vadd.f32 %v793, 1e-05
        %v798 = vadd.f32 %v794, 1e-05
        %v799 = vadd.f32 %v795, 1e-05
        %v800 = vrsqrt.pop %v796
        %v801 = vmul.f32 %v800, %v796
        %v802 = vmul.f32 %v801, %v800
        %v803 = vmul.f32 0.5, %v802
        %v804 = vsub.f32 1.5, %v803
        %v805 = vmul.f32 %v800, %v804
        %vm806 = vweird.f32 %v796
        %vm807 = vweird.f32 %v800
        %vm808 = vmor %vm806, %vm807
        %v809 = vsel %vm808, %v800, %v805
        %v810 = vrsqrt.pop %v797
        %v811 = vmul.f32 %v810, %v797
        %v812 = vmul.f32 %v811, %v810
        %v813 = vmul.f32 0.5, %v812
        %v814 = vsub.f32 1.5, %v813
        %v815 = vmul.f32 %v810, %v814
        %vm816 = vweird.f32 %v797
        %vm817 = vweird.f32 %v810
        %vm818 = vmor %vm816, %vm817
        %v819 = vsel %vm818, %v810, %v815
        %v820 = vrsqrt.pop %v798
        %v821 = vmul.f32 %v820, %v798
        %v822 = vmul.f32 %v821, %v820
        %v823 = vmul.f32 0.5, %v822
        %v824 = vsub.f32 1.5, %v823
        %v825 = vmul.f32 %v820, %v824
        %vm826 = vweird.f32 %v798
        %vm827 = vweird.f32 %v820
        %vm828 = vmor %vm826, %vm827
        %v829 = vsel %vm828, %v820, %v825
        %v830 = vrsqrt.pop %v799
        %v831 = vmul.f32 %v830, %v799
        %v832 = vmul.f32 %v831, %v830
        %v833 = vmul.f32 0.5, %v832
        %v834 = vsub.f32 1.5, %v833
        %v835 = vmul.f32 %v830, %v834
        %vm836 = vweird.f32 %v799
        %vm837 = vweird.f32 %v830
        %vm838 = vmor %vm836, %vm837
        %v839 = vsel %vm838, %v830, %v835
        %v840 = vmul.f32 %v776, %v809
        %v841 = vmul.f32 %v777, %v819
        %v842 = vmul.f32 %v778, %v829
        %v843 = vmul.f32 %v779, %v839
        %v844 = vmax.f32 %v840, 0.0
        %v845 = vmax.f32 %v841, 0.0
        %v846 = vmax.f32 %v842, 0.0
        %v847 = vmax.f32 %v843, 0.0
        %v848 = vpack.c.bf16 %v845, %v844
        %v849 = vpack.c.bf16 %v847, %v846
        %v850 = vld [vmem:[#allocation8] sm:$0xf]
        %v851 = vld [vmem:[#allocation8 + $0x4] sm:$0xf]
        %v852 = vld [vmem:[#allocation8 + $0x8] sm:$0xf]
        %v853 = vld [vmem:[#allocation8 + $0xc] sm:$0xf]
        %v854 = vld [vmem:[#allocation8 + $0x10] sm:$0xf]
        %v855 = vld [vmem:[#allocation8 + $0x14] sm:$0xf]
        %v856 = vld [vmem:[#allocation8 + $0x18] sm:$0xf]
        %v857 = vld [vmem:[#allocation8 + $0x1c] sm:$0xf]
        %v858 = vld [vmem:[#allocation8 + $0x20] sm:$0xf]
        %v859 = vld [vmem:[#allocation8 + $0x24] sm:$0xf]
        %v860 = vld [vmem:[#allocation8 + $0x28] sm:$0xf]
        %v861 = vld [vmem:[#allocation8 + $0x2c] sm:$0xf]
        %v862 = vld [vmem:[#allocation8 + $0x30] sm:$0xf]
        %v863 = vld [vmem:[#allocation8 + $0x34] sm:$0xf]
        %v864 = vld [vmem:[#allocation8 + $0x38] sm:$0xf]
        %v865 = vld [vmem:[#allocation8 + $0x3c] sm:$0xf]
        %v866 = vld [vmem:[%s7] sm:$0x1]
        %v868 = vperm.slane %v866, 0
        %v886 = vunpack.c.l.b16 %v850
        %v887 = vunpack.c.l.b16 %v851
        %v888 = vunpack.c.l.b16 %v852
        %v889 = vunpack.c.l.b16 %v853
        %v890 = vunpack.c.l.b16 %v854
        %v891 = vunpack.c.l.b16 %v855
        %v892 = vunpack.c.l.b16 %v856
        %v893 = vunpack.c.l.b16 %v857
        %v894 = vunpack.c.l.b16 %v858
        %v895 = vunpack.c.l.b16 %v859
        %v896 = vunpack.c.l.b16 %v860
        %v897 = vunpack.c.l.b16 %v861
        %v898 = vunpack.c.l.b16 %v862
        %v899 = vunpack.c.l.b16 %v863
        %v900 = vunpack.c.l.b16 %v864
        %v901 = vunpack.c.l.b16 %v865
        %v902 = vpack.c.b16 %v887, %v886
        %v903 = vpack.c.b16 %v889, %v888
        %v904 = vpack.c.b16 %v891, %v890
        %v905 = vpack.c.b16 %v893, %v892
        %v906 = vpack.c.b16 %v895, %v894
        %v907 = vpack.c.b16 %v897, %v896
        %v908 = vpack.c.b16 %v899, %v898
        %v909 = vpack.c.b16 %v901, %v900
        %918 = vmatpush.bf16.msra.mxu0 %v909
        %919 = vmatpush.bf16.msra.mxu0 %v908
        %920 = vmatpush.bf16.msra.mxu0 %v907
        %921 = vmatpush.bf16.msra.mxu0 %v906
        %922 = vmatpush.bf16.msra.mxu0 %v905
        %923 = vmatpush.bf16.msra.mxu0 %v904
        %924 = vmatpush.bf16.msra.mxu0 %v903
        %925 = vmatpush.bf16.msra.mxu0 %v902
        %926 = vmatmul.bf16.gmra.mxu0 %v848
        %v927 = vpop.f32.mrf.mxu0
        %v928 = vadd.f32 %v868, %v927
        %v929 = vpop.f32.mrf.mxu0
        %v930 = vadd.f32 %v868, %v929
        %931 = vmatmul.bf16.gmra.mxu0 %v849
        %v932 = vpop.f32.mrf.mxu0
        %v933 = vadd.f32 %v868, %v932
        %v934 = vpop.f32.mrf.mxu0
        %v935 = vadd.f32 %v868, %v934
        %936 = vdwg.mxu0
        %937 = vst [vmem:[%s380] sm:$0xff] %v928
        %938 = vst [vmem:[%s380 + $0x8] sm:$0xff] %v930
        %939 = vst [vmem:[%s380 + $0x10] sm:$0xff] %v933
        %940 = vst [vmem:[%s380 + $0x18] sm:$0xff] %v935
        %s941 = sand.u32 %s211, 1
        %s942 = scalar_lea.sflag [#allocation4], %s941
        %s943 = sand.u32 %s211, 1
        %s944 = smul.addr %s943, 32
        %s945 = scalar_lea.vmem [#allocation10], %s944
        // Predicated region
        $region69: #{tpu_custom_call.1} parent=51 // pred_check
          %p946 = pneg %p221
        $region70: #{tpu_custom_call.1} parent=51 // pred_check_branch
          %948 = sbr.rel (%p946) target = $region72
        $region71: #{tpu_custom_call.1} parent=51 // pred_region
          %s949 = smul.u32 4, %s25
          %951 = vsyncadd %s942, 0
          %s952 = smul.addr %s949, 8
          %s953 = scalar_lea.hbm %s8, %s952
          %s954 = sshll.u32 %s945, 4
          %s955 = int_to_ptr.vmem [resolvable:$true] %s954
          %s956 = sshll.u32 %s953, 4
          %s957 = int_to_ptr.hbm [resolvable:$true] %s956
          %962 = dma.vmem_to_hbm [thread:$0]  %s955, 512, %s957, %s942, 128, 128, 8
        $region72: #{tpu_custom_call.1} parent=51 // pred_fallthru
          _
      $region52: #{tpu_custom_call.1} parent=5 // pred_fallthru
        _
      %p963 = scmp.le.s32.totalorder 2, %s20
      // Predicated region
      $region73: #{tpu_custom_call.1} parent=5 // pred_check
        %p964 = pneg %p963
      $region74: #{tpu_custom_call.1} parent=5 // pred_check_branch
        %966 = sbr.rel (%p964) target = $region76
      $region75: #{tpu_custom_call.1} parent=5 // pred_region
        %s967 = ssub.s32 %s20, 2
        // Predicated region
        $region77: #{tpu_custom_call.1} parent=75 // pred_check
          %p968 = pneg %p227
        $region78: #{tpu_custom_call.1} parent=75 // pred_check_branch
          %970 = sbr.rel (%p968) target = $region80
        $region79: #{tpu_custom_call.1} parent=75 // pred_region
          %s971 = sand.u32 %s212, 1
          %s972 = scalar_lea.sflag [#allocation4], %s971
          %s973 = sand.u32 %s212, 1
          %s974 = smul.addr %s973, 32
          %s975 = scalar_lea.vmem [#allocation10], %s974
          %977 = dma.done %s972, 512
        $region80: #{tpu_custom_call.1} parent=75 // pred_fallthru
          _
      $region76: #{tpu_custom_call.1} parent=5 // pred_fallthru
        _
    $region6: #{tpu_custom_call.1} parent=1 // loop_footer
      %s24 = sadd.s32 1, %s20
    $region7: #{tpu_custom_call.1} parent=1 // loop_footer_branch
      %19 = sbr.rel target = $region3
    $region8: #{tpu_custom_call.1} parent=1 // loop_exit
      _
    %978 = vsyncpa [#allocation3], 1
    %s979 = scalar_lea.sflag [#allocation3], 1
    %980 = vsyncpa %s979, 1
    %981 = vsyncpa [#allocation6], 1
    %982 = vsyncpa [#allocation9], 1
    %983 = vsyncpa [#allocation4], 1
    %s984 = scalar_lea.sflag [#allocation4], 1
    %985 = vsyncpa %s984, 1

</llo_original>
